<compile_context>
chip_gen: v5e
topology: v5e:2x2
jax: 0.10.0
libtpu: 0.0.40
codegen_flags: <defaults>
</compile_context>

<pallas_src>
import functools
import math

import jax
import jax.numpy as jnp
from jax.experimental import pallas as pl
from jax.experimental.pallas import tpu as pltpu


# ----------------------------- in-kernel helpers ----------------------------

def _layernorm(x, gamma, beta, eps):
    # f32 LayerNorm with biased variance (matches the custom torch LayerNorm).
    mean = jnp.mean(x, axis=-1, keepdims=True)
    var = jnp.mean((x - mean) ** 2, axis=-1, keepdims=True)
    xn = (x - mean) * jax.lax.rsqrt(var + eps)
    return xn * gamma + beta


# ------------------- fused MHA + residual + LayerNorm kernel ----------------

def _mha_add_ln_kernel(*refs, n_head, scale, eps, self_attn):
    if self_attn:
        (xq_ref, m_ref, wqkv_ref, bqkv_ref, wo_ref, bo_ref,
         g_ref, b_ref, o_ref) = refs
    else:
        (xq_ref, xkv_ref, m_ref, wqkv_ref, bqkv_ref, wo_ref, bo_ref,
         g_ref, b_ref, o_ref) = refs

    D = xq_ref.shape[-1]
    hd = D // n_head

    xq = xq_ref[0]                      # (Sq, D) f32 -- also the residual
    mask = m_ref[0, 0]                  # (Sq, Sk) f32 (0/1)
    wqkv = wqkv_ref[...]                # (D, 3D) f32
    bqkv = bqkv_ref[...]                # (1, 3D) f32

    xq_b = xq.astype(jnp.bfloat16)
    if self_attn:
        # Single fused QKV projection (q-input == kv-input).
        qkv = jnp.dot(xq_b, wqkv.astype(jnp.bfloat16),
                      preferred_element_type=jnp.float32) + bqkv
        q, k, v = qkv[:, :D], qkv[:, D:2 * D], qkv[:, 2 * D:]
    else:
        xkv_b = xkv_ref[0].astype(jnp.bfloat16)
        q = jnp.dot(xq_b, wqkv[:, :D].astype(jnp.bfloat16),
                    preferred_element_type=jnp.float32) + bqkv[:, :D]
        kv = jnp.dot(xkv_b, wqkv[:, D:].astype(jnp.bfloat16),
                     preferred_element_type=jnp.float32) + bqkv[:, D:]
        k, v = kv[:, :D], kv[:, D:]

    # Per-head attention (static unroll over heads; softmax kept in f32).
    ctx_parts = []
    for h in range(n_head):
        sl = slice(h * hd, (h + 1) * hd)
        qh = q[:, sl].astype(jnp.bfloat16)
        kh = k[:, sl].astype(jnp.bfloat16)
        vh = v[:, sl].astype(jnp.bfloat16)
        # q @ k^T without an explicit transpose (contract last dims).
        s = jax.lax.dot_general(qh, kh, (((1,), (1,)), ((), ())),
                                preferred_element_type=jnp.float32) * scale
        s = jnp.where(mask == 0, jnp.float32(-1e9), s)
        s = s - jnp.max(s, axis=-1, keepdims=True)
        p = jnp.exp(s)
        p = p * pl.reciprocal(jnp.sum(p, axis=-1, keepdims=True), approx=True)
        ctx_parts.append(jnp.dot(p.astype(jnp.bfloat16), vh,
                                 preferred_element_type=jnp.float32))
    ctx = jnp.concatenate(ctx_parts, axis=-1)            # (Sq, D) f32

    attn = jnp.dot(ctx.astype(jnp.bfloat16), wo_ref[...].astype(jnp.bfloat16),
                   preferred_element_type=jnp.float32) + bo_ref[...]
    y = xq + attn                                        # residual add (f32)
    o_ref[0] = _layernorm(y, g_ref[...], b_ref[...], eps).astype(o_ref.dtype)


def mha_add_ln(xq, xkv, mask, p, gamma, beta, *, n_head, self_attn, eps=1e-12):
    """Fused multi-head attention + residual(xq) + LayerNorm.

    xq: (B, Sq, D) query input (also the residual), xkv: (B, Sk, D),
    mask: (B, 1, Sq, Sk) float 0/1.  One grid step per batch element.
    """
    B, Sq, D = xq.shape
    Sk = xkv.shape[1]
    hd = D // n_head
    scale = 1.0 / math.sqrt(hd)

    kernel = functools.partial(_mha_add_ln_kernel, n_head=n_head, scale=scale,
                               eps=eps, self_attn=self_attn)

    in_specs = [pl.BlockSpec((1, Sq, D), lambda b: (b, 0, 0))]
    inputs = [xq]
    if not self_attn:
        in_specs.append(pl.BlockSpec((1, Sk, D), lambda b: (b, 0, 0)))
        inputs.append(xkv)
    in_specs += [
        pl.BlockSpec((1, 1, Sq, Sk), lambda b: (b, 0, 0, 0)),   # mask, no head bcast
        pl.BlockSpec((D, 3 * D), lambda b: (0, 0)),             # fused wqkv
        pl.BlockSpec((1, 3 * D), lambda b: (0, 0)),
        pl.BlockSpec((D, D), lambda b: (0, 0)),
        pl.BlockSpec((1, D), lambda b: (0, 0)),
        pl.BlockSpec((1, D), lambda b: (0, 0)),                 # gamma
        pl.BlockSpec((1, D), lambda b: (0, 0)),                 # beta
    ]
    inputs += [mask, p["wqkv"], p["bqkv"].reshape(1, 3 * D),
               p["wo"], p["bo"].reshape(1, D),
               gamma.reshape(1, D), beta.reshape(1, D)]

    return pl.pallas_call(
        kernel,
        out_shape=jax.ShapeDtypeStruct((B, Sq, D), xq.dtype),
        grid=(B,),
        in_specs=in_specs,
        out_specs=pl.BlockSpec((1, Sq, D), lambda b: (b, 0, 0)),
        compiler_params=pltpu.CompilerParams(dimension_semantics=("parallel",)),
    )(*inputs)


# --------------------- fused FFN + residual + LayerNorm ---------------------

def _ffn_add_ln_kernel(x_ref, w1_ref, b1_ref, w2_ref, b2_ref, g_ref, b_ref,
                       o_ref, *, eps):
    x = x_ref[...]                                       # (tm, D) f32 residual
    h = jnp.dot(x.astype(jnp.bfloat16), w1_ref[...].astype(jnp.bfloat16),
                preferred_element_type=jnp.float32) + b1_ref[...]
    h = jnp.maximum(h, 0.0)                              # ReLU in f32
    # TODO(synk): dropout inside the FFN is identity (eval mode)
    y = jnp.dot(h.astype(jnp.bfloat16), w2_ref[...].astype(jnp.bfloat16),
                preferred_element_type=jnp.float32) + b2_ref[...]
    y = x + y                                            # residual add
    o_ref[...] = _layernorm(y, g_ref[...], b_ref[...], eps).astype(o_ref.dtype)


def _row_tile(M):
    for t in (512, 256, 128, 64, 32, 16, 8):
        if M % t == 0:
            return min(t, M)
    return M


def ffn_add_ln(x, p, gamma, beta, eps=1e-12):
    """x: (B, S, D). Fused (w1 -> ReLU -> w2 -> +x -> LayerNorm) over row tiles."""
    B, S, D = x.shape
    M = B * S
    F = p["w1"].shape[1]
    tm = _row_tile(M)
    xf = x.reshape(M, D)

    out = pl.pallas_call(
        functools.partial(_ffn_add_ln_kernel, eps=eps),
        out_shape=jax.ShapeDtypeStruct((M, D), x.dtype),
        grid=(M // tm,),
        in_specs=[
            pl.BlockSpec((tm, D), lambda i: (i, 0)),
            pl.BlockSpec((D, F), lambda i: (0, 0)),
            pl.BlockSpec((1, F), lambda i: (0, 0)),
            pl.BlockSpec((F, D), lambda i: (0, 0)),
            pl.BlockSpec((1, D), lambda i: (0, 0)),
            pl.BlockSpec((1, D), lambda i: (0, 0)),
            pl.BlockSpec((1, D), lambda i: (0, 0)),
        ],
        out_specs=pl.BlockSpec((tm, D), lambda i: (i, 0)),
        compiler_params=pltpu.CompilerParams(dimension_semantics=("parallel",)),
    )(xf, p["w1"], p["b1"].reshape(1, F), p["w2"], p["b2"].reshape(1, D),
      gamma.reshape(1, D), beta.reshape(1, D))
    return out.reshape(B, S, D)


# ------------------------------ decoder layer --------------------------------

def decoder_layer(params, decoder_inputs, encoder_outputs, target_mask,
                  source_mask, n_head):
    # self attention + add & LN1   (dropout1 = identity, eval mode)
    x = mha_add_ln(decoder_inputs, decoder_inputs, target_mask, params["attn"],
                   params["ln1_g"], params["ln1_b"],
                   n_head=n_head, self_attn=True)

    # cross attention + add & LN2  (reference reuses self.attention weights)
    if encoder_outputs is not None:
        x = mha_add_ln(x, encoder_outputs, source_mask, params["attn"],
                       params["ln2_g"], params["ln2_b"],
                       n_head=n_head, self_attn=False)

    # feed forward + add & LN3     (dropout3 = identity)
    x = ffn_add_ln(x, params["ff"], params["ln3_g"], params["ln3_b"])
    return x


# ------------------------------ param init -----------------------------------

def _uniform(key, shape, fan_in):
    bound = 1.0 / math.sqrt(fan_in)
    return jax.random.uniform(key, shape, jnp.float32, -bound, bound)


def init_params(key, d_model, ff_dim):
    ks = jax.random.split(key, 8)
    attn = {
        "wqkv": _uniform(ks[0], (d_model, 3 * d_model), d_model),  # [wq|wk|wv]
        "bqkv": _uniform(ks[1], (3 * d_model,), d_model),
        "wo": _uniform(ks[2], (d_model, d_model), d_model),
        "bo": _uniform(ks[3], (d_model,), d_model),
    }
    ff = {
        "w1": _uniform(ks[4], (d_model, ff_dim), d_model),
        "b1": _uniform(ks[5], (ff_dim,), d_model),
        "w2": _uniform(ks[6], (ff_dim, d_model), ff_dim),
        "b2": _uniform(ks[7], (d_model,), ff_dim),
    }
    ones = jnp.ones((d_model,), jnp.float32)
    zeros = jnp.zeros((d_model,), jnp.float32)
    return {
        "attn": attn, "ff": ff,
        "ln1_g": ones, "ln1_b": zeros,
        "ln2_g": ones, "ln2_b": zeros,
        "ln3_g": ones, "ln3_b": zeros,
    }


# --------------------------------- main ---------------------------------------

if __name__ == "__main__":
    B, S, d_model, ff_dim, n_head = 2, 8, 32, 64, 4

    key = jax.random.PRNGKey(0)
    k_dec, k_enc, k_par = jax.random.split(key, 3)

    decoder_inputs = jax.random.normal(k_dec, (B, S, d_model), jnp.float32)
    encoder_outputs = jax.random.normal(k_enc, (B, S, d_model), jnp.float32)

    # causal target mask (B, 1, S, S); full source mask (B, 1, S, S)
    causal = jnp.tril(jnp.ones((S, S), jnp.float32))
    target_mask = jnp.broadcast_to(causal, (B, 1, S, S))
    source_mask = jnp.ones((B, 1, S, S), jnp.float32)

    params = init_params(k_par, d_model, ff_dim)

    fwd = jax.jit(functools.partial(decoder_layer, n_head=n_head))
    out = fwd(params, decoder_inputs, encoder_outputs, target_mask, source_mask)
    jax.block_until_ready(out)

    assert out.shape == (B, S, d_model) and out.dtype == jnp.float32
    print("KERNEL_OK")
</pallas_src>

<mosaic_0001>
module attributes {stable_mosaic.version = 11 : i64} {
  func.func @_ffn_add_ln_kernel(%arg0: i32, %arg1: memref<16x32xf32, #tpu.memory_space<vmem>>, %arg2: memref<32x64xf32, #tpu.memory_space<vmem>>, %arg3: memref<1x64xf32, #tpu.memory_space<vmem>>, %arg4: memref<64x32xf32, #tpu.memory_space<vmem>>, %arg5: memref<1x32xf32, #tpu.memory_space<vmem>>, %arg6: memref<1x32xf32, #tpu.memory_space<vmem>>, %arg7: memref<1x32xf32, #tpu.memory_space<vmem>>, %arg8: memref<16x32xf32, #tpu.memory_space<vmem>>) attributes {dimension_semantics = [#tpu.dimension_semantics<parallel>], iteration_bounds = array<i64: 1>, scalar_prefetch = 0 : i64, scratch_operands = 0 : i64, tpu.core_type = #tpu.core_type<tc>, window_params = [{transform_indices = @transform_0, window_bounds = array<i64: 16, 32>}, {pipeline_mode = #tpu.pipeline_mode<synchronous>, transform_indices = @transform_1, window_bounds = array<i64: 32, 64>}, {pipeline_mode = #tpu.pipeline_mode<synchronous>, transform_indices = @transform_2, window_bounds = array<i64: 1, 64>}, {pipeline_mode = #tpu.pipeline_mode<synchronous>, transform_indices = @transform_3, window_bounds = array<i64: 64, 32>}, {pipeline_mode = #tpu.pipeline_mode<synchronous>, transform_indices = @transform_4, window_bounds = array<i64: 1, 32>}, {pipeline_mode = #tpu.pipeline_mode<synchronous>, transform_indices = @transform_5, window_bounds = array<i64: 1, 32>}, {pipeline_mode = #tpu.pipeline_mode<synchronous>, transform_indices = @transform_6, window_bounds = array<i64: 1, 32>}, {transform_indices = @transform_7, window_bounds = array<i64: 16, 32>}]} {
    %c0 = arith.constant 0 : index
    %c0_0 = arith.constant 0 : index
    %0 = vector.load %arg1[%c0, %c0_0] : memref<16x32xf32, #tpu.memory_space<vmem>>, vector<16x32xf32>
    %1 = arith.truncf %0 : vector<16x32xf32> to vector<16x32xbf16>
    %c0_1 = arith.constant 0 : index
    %c0_2 = arith.constant 0 : index
    %2 = vector.load %arg2[%c0_1, %c0_2] : memref<32x64xf32, #tpu.memory_space<vmem>>, vector<32x64xf32>
    %3 = arith.truncf %2 : vector<32x64xf32> to vector<32x64xbf16>
    %cst = arith.constant dense<0.000000e+00> : vector<16x64xf32>
    %4 = tpu.matmul %1, %3, %cst {dimension_numbers = #tpu.dot_dimension_numbers<[1], [0], [0], [1], [0, 0, 1, 1], [], []>} : vector<16x32xbf16>, vector<32x64xbf16>, vector<16x64xf32> -> vector<16x64xf32>
    %c0_3 = arith.constant 0 : index
    %c0_4 = arith.constant 0 : index
    %5 = vector.load %arg3[%c0_3, %c0_4] : memref<1x64xf32, #tpu.memory_space<vmem>>, vector<1x64xf32>
    %6 = vector.broadcast %5 : vector<1x64xf32> to vector<16x64xf32>
    %7 = arith.addf %4, %6 : vector<16x64xf32>
    %cst_5 = arith.constant 0.000000e+00 : f32
    %8 = vector.broadcast %cst_5 : f32 to vector<16x64xf32>
    %9 = arith.maximumf %7, %8 : vector<16x64xf32>
    %10 = arith.truncf %9 : vector<16x64xf32> to vector<16x64xbf16>
    %c0_6 = arith.constant 0 : index
    %c0_7 = arith.constant 0 : index
    %11 = vector.load %arg4[%c0_6, %c0_7] : memref<64x32xf32, #tpu.memory_space<vmem>>, vector<64x32xf32>
    %12 = arith.truncf %11 : vector<64x32xf32> to vector<64x32xbf16>
    %cst_8 = arith.constant dense<0.000000e+00> : vector<16x32xf32>
    %13 = tpu.matmul %10, %12, %cst_8 {dimension_numbers = #tpu.dot_dimension_numbers<[1], [0], [0], [1], [0, 0, 1, 1], [], []>} : vector<16x64xbf16>, vector<64x32xbf16>, vector<16x32xf32> -> vector<16x32xf32>
    %c0_9 = arith.constant 0 : index
    %c0_10 = arith.constant 0 : index
    %14 = vector.load %arg5[%c0_9, %c0_10] : memref<1x32xf32, #tpu.memory_space<vmem>>, vector<1x32xf32>
    %15 = vector.broadcast %14 : vector<1x32xf32> to vector<16x32xf32>
    %16 = arith.addf %13, %15 : vector<16x32xf32>
    %17 = arith.addf %0, %16 : vector<16x32xf32>
    %c0_11 = arith.constant 0 : index
    %c0_12 = arith.constant 0 : index
    %18 = vector.load %arg6[%c0_11, %c0_12] : memref<1x32xf32, #tpu.memory_space<vmem>>, vector<1x32xf32>
    %c0_13 = arith.constant 0 : index
    %c0_14 = arith.constant 0 : index
    %19 = vector.load %arg7[%c0_13, %c0_14] : memref<1x32xf32, #tpu.memory_space<vmem>>, vector<1x32xf32>
    %cst_15 = arith.constant dense<0.000000e+00> : vector<16xf32>
    %20 = vector.multi_reduction <add>, %17, %cst_15 [1] : vector<16x32xf32> to vector<16xf32>
    %21 = vector.shape_cast %20 : vector<16xf32> to vector<16x1xf32>
    %cst_16 = arith.constant 3.200000e+01 : f32
    %22 = vector.broadcast %cst_16 : f32 to vector<16x1xf32>
    %23 = arith.divf %21, %22 : vector<16x1xf32>
    %24 = vector.broadcast %23 : vector<16x1xf32> to vector<16x32xf32>
    %25 = arith.subf %17, %24 : vector<16x32xf32>
    %26 = arith.mulf %25, %25 : vector<16x32xf32>
    %cst_17 = arith.constant dense<0.000000e+00> : vector<16xf32>
    %27 = vector.multi_reduction <add>, %26, %cst_17 [1] : vector<16x32xf32> to vector<16xf32>
    %28 = vector.shape_cast %27 : vector<16xf32> to vector<16x1xf32>
    %cst_18 = arith.constant 3.200000e+01 : f32
    %29 = vector.broadcast %cst_18 : f32 to vector<16x1xf32>
    %30 = arith.divf %28, %29 : vector<16x1xf32>
    %31 = vector.broadcast %23 : vector<16x1xf32> to vector<16x32xf32>
    %32 = arith.subf %17, %31 : vector<16x32xf32>
    %cst_19 = arith.constant 9.99999996E-13 : f32
    %33 = vector.broadcast %cst_19 : f32 to vector<16x1xf32>
    %34 = arith.addf %30, %33 : vector<16x1xf32>
    %35 = math.rsqrt %34 : vector<16x1xf32>
    %36 = vector.broadcast %35 : vector<16x1xf32> to vector<16x32xf32>
    %37 = arith.mulf %32, %36 : vector<16x32xf32>
    %38 = vector.broadcast %18 : vector<1x32xf32> to vector<16x32xf32>
    %39 = arith.mulf %37, %38 : vector<16x32xf32>
    %40 = vector.broadcast %19 : vector<1x32xf32> to vector<16x32xf32>
    %41 = arith.addf %39, %40 : vector<16x32xf32>
    %c0_20 = arith.constant 0 : index
    %c0_21 = arith.constant 0 : index
    %42 = vector.load %arg8[%c0_20, %c0_21] : memref<16x32xf32, #tpu.memory_space<vmem>>, vector<16x32xf32>
    tpu.vector_store %arg8[%c0_20, %c0_21], %41 {strides = array<i32>} : memref<16x32xf32, #tpu.memory_space<vmem>>, vector<16x32xf32>,
    return
  }
  func.func @transform_0(%arg0: i32) -> (i32, i32) {
    %c0_i32 = arith.constant 0 : i32
    %c0_i32_0 = arith.constant 0 : i32
    return %arg0, %c0_i32 : i32, i32
  }
  func.func @transform_1(%arg0: i32) -> (i32, i32) {
    %c0_i32 = arith.constant 0 : i32
    %c0_i32_0 = arith.constant 0 : i32
    %c0_i32_1 = arith.constant 0 : i32
    return %c0_i32, %c0_i32_0 : i32, i32
  }
  func.func @transform_2(%arg0: i32) -> (i32, i32) {
    %c0_i32 = arith.constant 0 : i32
    %c0_i32_0 = arith.constant 0 : i32
    %c0_i32_1 = arith.constant 0 : i32
    return %c0_i32, %c0_i32_0 : i32, i32
  }
  func.func @transform_3(%arg0: i32) -> (i32, i32) {
    %c0_i32 = arith.constant 0 : i32
    %c0_i32_0 = arith.constant 0 : i32
    %c0_i32_1 = arith.constant 0 : i32
    return %c0_i32, %c0_i32_0 : i32, i32
  }
  func.func @transform_4(%arg0: i32) -> (i32, i32) {
    %c0_i32 = arith.constant 0 : i32
    %c0_i32_0 = arith.constant 0 : i32
    %c0_i32_1 = arith.constant 0 : i32
    return %c0_i32, %c0_i32_0 : i32, i32
  }
  func.func @transform_5(%arg0: i32) -> (i32, i32) {
    %c0_i32 = arith.constant 0 : i32
    %c0_i32_0 = arith.constant 0 : i32
    %c0_i32_1 = arith.constant 0 : i32
    return %c0_i32, %c0_i32_0 : i32, i32
  }
  func.func @transform_6(%arg0: i32) -> (i32, i32) {
    %c0_i32 = arith.constant 0 : i32
    %c0_i32_0 = arith.constant 0 : i32
    %c0_i32_1 = arith.constant 0 : i32
    return %c0_i32, %c0_i32_0 : i32, i32
  }
  func.func @transform_7(%arg0: i32) -> (i32, i32) {
    %c0_i32 = arith.constant 0 : i32
    %c0_i32_0 = arith.constant 0 : i32
    return %arg0, %c0_i32 : i32, i32
  }
}

module attributes {stable_mosaic.version = 11 : i64} {
  func.func @_mha_add_ln_kernel(%arg0: i32, %arg1: memref<1x8x32xf32, #tpu.memory_space<vmem>>, %arg2: memref<1x8x32xf32, #tpu.memory_space<vmem>>, %arg3: memref<1x1x8x8xf32, #tpu.memory_space<vmem>>, %arg4: memref<32x96xf32, #tpu.memory_space<vmem>>, %arg5: memref<1x96xf32, #tpu.memory_space<vmem>>, %arg6: memref<32x32xf32, #tpu.memory_space<vmem>>, %arg7: memref<1x32xf32, #tpu.memory_space<vmem>>, %arg8: memref<1x32xf32, #tpu.memory_space<vmem>>, %arg9: memref<1x32xf32, #tpu.memory_space<vmem>>, %arg10: memref<1x8x32xf32, #tpu.memory_space<vmem>>) attributes {dimension_semantics = [#tpu.dimension_semantics<parallel>], iteration_bounds = array<i64: 2>, scalar_prefetch = 0 : i64, scratch_operands = 0 : i64, tpu.core_type = #tpu.core_type<tc>, window_params = [{transform_indices = @transform_0, window_bounds = array<i64: 1, 8, 32>}, {transform_indices = @transform_1, window_bounds = array<i64: 1, 8, 32>}, {transform_indices = @transform_2, window_bounds = array<i64: 1, 1, 8, 8>}, {pipeline_mode = #tpu.pipeline_mode<synchronous>, transform_indices = @transform_3, window_bounds = array<i64: 32, 96>}, {pipeline_mode = #tpu.pipeline_mode<synchronous>, transform_indices = @transform_4, window_bounds = array<i64: 1, 96>}, {pipeline_mode = #tpu.pipeline_mode<synchronous>, transform_indices = @transform_5, window_bounds = array<i64: 32, 32>}, {pipeline_mode = #tpu.pipeline_mode<synchronous>, transform_indices = @transform_6, window_bounds = array<i64: 1, 32>}, {pipeline_mode = #tpu.pipeline_mode<synchronous>, transform_indices = @transform_7, window_bounds = array<i64: 1, 32>}, {pipeline_mode = #tpu.pipeline_mode<synchronous>, transform_indices = @transform_8, window_bounds = array<i64: 1, 32>}, {transform_indices = @transform_9, window_bounds = array<i64: 1, 8, 32>}]} {
    %c0 = arith.constant 0 : index
    %c0_0 = arith.constant 0 : index
    %c0_1 = arith.constant 0 : index
    %0 = vector.load %arg1[%c0, %c0_0, %c0_1] : memref<1x8x32xf32, #tpu.memory_space<vmem>>, vector<1x8x32xf32>
    %1 = vector.shape_cast %0 : vector<1x8x32xf32> to vector<8x32xf32>
    %c0_2 = arith.constant 0 : index
    %c0_3 = arith.constant 0 : index
    %c0_4 = arith.constant 0 : index
    %c0_5 = arith.constant 0 : index
    %2 = vector.load %arg3[%c0_2, %c0_3, %c0_4, %c0_5] : memref<1x1x8x8xf32, #tpu.memory_space<vmem>>, vector<1x1x8x8xf32>
    %3 = vector.shape_cast %2 : vector<1x1x8x8xf32> to vector<8x8xf32>
    %c0_6 = arith.constant 0 : index
    %c0_7 = arith.constant 0 : index
    %4 = vector.load %arg4[%c0_6, %c0_7] : memref<32x96xf32, #tpu.memory_space<vmem>>, vector<32x96xf32>
    %c0_8 = arith.constant 0 : index
    %c0_9 = arith.constant 0 : index
    %5 = vector.load %arg5[%c0_8, %c0_9] : memref<1x96xf32, #tpu.memory_space<vmem>>, vector<1x96xf32>
    %6 = arith.truncf %1 : vector<8x32xf32> to vector<8x32xbf16>
    %c0_10 = arith.constant 0 : index
    %c0_11 = arith.constant 0 : index
    %c0_12 = arith.constant 0 : index
    %7 = vector.load %arg2[%c0_10, %c0_11, %c0_12] : memref<1x8x32xf32, #tpu.memory_space<vmem>>, vector<1x8x32xf32>
    %8 = vector.shape_cast %7 : vector<1x8x32xf32> to vector<8x32xf32>
    %9 = arith.truncf %8 : vector<8x32xf32> to vector<8x32xbf16>
    %10 = vector.extract_strided_slice %4 {offsets = [0, 0], sizes = [32, 32], strides = [1, 1]} : vector<32x96xf32> to vector<32x32xf32>
    %11 = arith.truncf %10 : vector<32x32xf32> to vector<32x32xbf16>
    %cst = arith.constant dense<0.000000e+00> : vector<8x32xf32>
    %12 = tpu.matmul %6, %11, %cst {dimension_numbers = #tpu.dot_dimension_numbers<[1], [0], [0], [1], [0, 0, 1, 1], [], []>} : vector<8x32xbf16>, vector<32x32xbf16>, vector<8x32xf32> -> vector<8x32xf32>
    %13 = vector.extract_strided_slice %5 {offsets = [0, 0], sizes = [1, 32], strides = [1, 1]} : vector<1x96xf32> to vector<1x32xf32>
    %14 = vector.broadcast %13 : vector<1x32xf32> to vector<8x32xf32>
    %15 = arith.addf %12, %14 : vector<8x32xf32>
    %16 = vector.extract_strided_slice %4 {offsets = [0, 32], sizes = [32, 64], strides = [1, 1]} : vector<32x96xf32> to vector<32x64xf32>
    %17 = arith.truncf %16 : vector<32x64xf32> to vector<32x64xbf16>
    %cst_13 = arith.constant dense<0.000000e+00> : vector<8x64xf32>
    %18 = tpu.matmul %9, %17, %cst_13 {dimension_numbers = #tpu.dot_dimension_numbers<[1], [0], [0], [1], [0, 0, 1, 1], [], []>} : vector<8x32xbf16>, vector<32x64xbf16>, vector<8x64xf32> -> vector<8x64xf32>
    %19 = vector.extract_strided_slice %5 {offsets = [0, 32], sizes = [1, 64], strides = [1, 1]} : vector<1x96xf32> to vector<1x64xf32>
    %20 = vector.broadcast %19 : vector<1x64xf32> to vector<8x64xf32>
    %21 = arith.addf %18, %20 : vector<8x64xf32>
    %22 = vector.extract_strided_slice %21 {offsets = [0, 0], sizes = [8, 32], strides = [1, 1]} : vector<8x64xf32> to vector<8x32xf32>
    %23 = vector.extract_strided_slice %21 {offsets = [0, 32], sizes = [8, 32], strides = [1, 1]} : vector<8x64xf32> to vector<8x32xf32>
    %24 = vector.extract_strided_slice %15 {offsets = [0, 0], sizes = [8, 8], strides = [1, 1]} : vector<8x32xf32> to vector<8x8xf32>
    %25 = arith.truncf %24 : vector<8x8xf32> to vector<8x8xbf16>
    %26 = vector.extract_strided_slice %22 {offsets = [0, 0], sizes = [8, 8], strides = [1, 1]} : vector<8x32xf32> to vector<8x8xf32>
    %27 = arith.truncf %26 : vector<8x8xf32> to vector<8x8xbf16>
    %28 = vector.extract_strided_slice %23 {offsets = [0, 0], sizes = [8, 8], strides = [1, 1]} : vector<8x32xf32> to vector<8x8xf32>
    %29 = arith.truncf %28 : vector<8x8xf32> to vector<8x8xbf16>
    %cst_14 = arith.constant dense<0.000000e+00> : vector<8x8xf32>
    %30 = tpu.matmul %25, %27, %cst_14 {dimension_numbers = #tpu.dot_dimension_numbers<[1], [1], [0], [0], [0, 0, 1, 0], [], []>} : vector<8x8xbf16>, vector<8x8xbf16>, vector<8x8xf32> -> vector<8x8xf32>
    %cst_15 = arith.constant 0.353553385 : f32
    %31 = vector.broadcast %cst_15 : f32 to vector<8x8xf32>
    %32 = arith.mulf %30, %31 : vector<8x8xf32>
    %cst_16 = arith.constant 0.000000e+00 : f32
    %33 = vector.broadcast %cst_16 : f32 to vector<8x8xf32>
    %34 = arith.cmpf oeq, %3, %33 : vector<8x8xf32>
    %cst_17 = arith.constant -1.000000e+09 : f32
    %35 = vector.broadcast %cst_17 : f32 to vector<8x8xf32>
    %36 = arith.select %34, %35, %32 : vector<8x8xi1>, vector<8x8xf32>
    %cst_18 = arith.constant dense<0xFF800000> : vector<8xf32>
    %37 = vector.multi_reduction <maximumf>, %36, %cst_18 [1] : vector<8x8xf32> to vector<8xf32>
    %38 = vector.shape_cast %37 : vector<8xf32> to vector<8x1xf32>
    %39 = vector.broadcast %38 : vector<8x1xf32> to vector<8x8xf32>
    %40 = arith.subf %36, %39 : vector<8x8xf32>
    %41 = math.exp %40 : vector<8x8xf32>
    %cst_19 = arith.constant dense<0.000000e+00> : vector<8xf32>
    %42 = vector.multi_reduction <add>, %41, %cst_19 [1] : vector<8x8xf32> to vector<8xf32>
    %43 = vector.shape_cast %42 : vector<8xf32> to vector<8x1xf32>
    %44 = tpu.reciprocal %43 {approx = true} : vector<8x1xf32> -> vector<8x1xf32>
    %45 = vector.broadcast %44 : vector<8x1xf32> to vector<8x8xf32>
    %46 = arith.mulf %41, %45 : vector<8x8xf32>
    %47 = arith.truncf %46 : vector<8x8xf32> to vector<8x8xbf16>
    %cst_20 = arith.constant dense<0.000000e+00> : vector<8x8xf32>
    %48 = tpu.matmul %47, %29, %cst_20 {dimension_numbers = #tpu.dot_dimension_numbers<[1], [0], [0], [1], [0, 0, 1, 1], [], []>} : vector<8x8xbf16>, vector<8x8xbf16>, vector<8x8xf32> -> vector<8x8xf32>
    %49 = vector.extract_strided_slice %15 {offsets = [0, 8], sizes = [8, 8], strides = [1, 1]} : vector<8x32xf32> to vector<8x8xf32>
    %50 = arith.truncf %49 : vector<8x8xf32> to vector<8x8xbf16>
    %51 = vector.extract_strided_slice %22 {offsets = [0, 8], sizes = [8, 8], strides = [1, 1]} : vector<8x32xf32> to vector<8x8xf32>
    %52 = arith.truncf %51 : vector<8x8xf32> to vector<8x8xbf16>
    %53 = vector.extract_strided_slice %23 {offsets = [0, 8], sizes = [8, 8], strides = [1, 1]} : vector<8x32xf32> to vector<8x8xf32>
    %54 = arith.truncf %53 : vector<8x8xf32> to vector<8x8xbf16>
    %cst_21 = arith.constant dense<0.000000e+00> : vector<8x8xf32>
    %55 = tpu.matmul %50, %52, %cst_21 {dimension_numbers = #tpu.dot_dimension_numbers<[1], [1], [0], [0], [0, 0, 1, 0], [], []>} : vector<8x8xbf16>, vector<8x8xbf16>, vector<8x8xf32> -> vector<8x8xf32>
    %cst_22 = arith.constant 0.353553385 : f32
    %56 = vector.broadcast %cst_22 : f32 to vector<8x8xf32>
    %57 = arith.mulf %55, %56 : vector<8x8xf32>
    %cst_23 = arith.constant 0.000000e+00 : f32
    %58 = vector.broadcast %cst_23 : f32 to vector<8x8xf32>
    %59 = arith.cmpf oeq, %3, %58 : vector<8x8xf32>
    %cst_24 = arith.constant -1.000000e+09 : f32
    %60 = vector.broadcast %cst_24 : f32 to vector<8x8xf32>
    %61 = arith.select %59, %60, %57 : vector<8x8xi1>, vector<8x8xf32>
    %cst_25 = arith.constant dense<0xFF800000> : vector<8xf32>
    %62 = vector.multi_reduction <maximumf>, %61, %cst_25 [1] : vector<8x8xf32> to vector<8xf32>
    %63 = vector.shape_cast %62 : vector<8xf32> to vector<8x1xf32>
    %64 = vector.broadcast %63 : vector<8x1xf32> to vector<8x8xf32>
    %65 = arith.subf %61, %64 : vector<8x8xf32>
    %66 = math.exp %65 : vector<8x8xf32>
    %cst_26 = arith.constant dense<0.000000e+00> : vector<8xf32>
    %67 = vector.multi_reduction <add>, %66, %cst_26 [1] : vector<8x8xf32> to vector<8xf32>
    %68 = vector.shape_cast %67 : vector<8xf32> to vector<8x1xf32>
    %69 = tpu.reciprocal %68 {approx = true} : vector<8x1xf32> -> vector<8x1xf32>
    %70 = vector.broadcast %69 : vector<8x1xf32> to vector<8x8xf32>
    %71 = arith.mulf %66, %70 : vector<8x8xf32>
    %72 = arith.truncf %71 : vector<8x8xf32> to vector<8x8xbf16>
    %cst_27 = arith.constant dense<0.000000e+00> : vector<8x8xf32>
    %73 = tpu.matmul %72, %54, %cst_27 {dimension_numbers = #tpu.dot_dimension_numbers<[1], [0], [0], [1], [0, 0, 1, 1], [], []>} : vector<8x8xbf16>, vector<8x8xbf16>, vector<8x8xf32> -> vector<8x8xf32>
    %74 = vector.extract_strided_slice %15 {offsets = [0, 16], sizes = [8, 8], strides = [1, 1]} : vector<8x32xf32> to vector<8x8xf32>
    %75 = arith.truncf %74 : vector<8x8xf32> to vector<8x8xbf16>
    %76 = vector.extract_strided_slice %22 {offsets = [0, 16], sizes = [8, 8], strides = [1, 1]} : vector<8x32xf32> to vector<8x8xf32>
    %77 = arith.truncf %76 : vector<8x8xf32> to vector<8x8xbf16>
    %78 = vector.extract_strided_slice %23 {offsets = [0, 16], sizes = [8, 8], strides = [1, 1]} : vector<8x32xf32> to vector<8x8xf32>
    %79 = arith.truncf %78 : vector<8x8xf32> to vector<8x8xbf16>
    %cst_28 = arith.constant dense<0.000000e+00> : vector<8x8xf32>
    %80 = tpu.matmul %75, %77, %cst_28 {dimension_numbers = #tpu.dot_dimension_numbers<[1], [1], [0], [0], [0, 0, 1, 0], [], []>} : vector<8x8xbf16>, vector<8x8xbf16>, vector<8x8xf32> -> vector<8x8xf32>
    %cst_29 = arith.constant 0.353553385 : f32
    %81 = vector.broadcast %cst_29 : f32 to vector<8x8xf32>
    %82 = arith.mulf %80, %81 : vector<8x8xf32>
    %cst_30 = arith.constant 0.000000e+00 : f32
    %83 = vector.broadcast %cst_30 : f32 to vector<8x8xf32>
    %84 = arith.cmpf oeq, %3, %83 : vector<8x8xf32>
    %cst_31 = arith.constant -1.000000e+09 : f32
    %85 = vector.broadcast %cst_31 : f32 to vector<8x8xf32>
    %86 = arith.select %84, %85, %82 : vector<8x8xi1>, vector<8x8xf32>
    %cst_32 = arith.constant dense<0xFF800000> : vector<8xf32>
    %87 = vector.multi_reduction <maximumf>, %86, %cst_32 [1] : vector<8x8xf32> to vector<8xf32>
    %88 = vector.shape_cast %87 : vector<8xf32> to vector<8x1xf32>
    %89 = vector.broadcast %88 : vector<8x1xf32> to vector<8x8xf32>
    %90 = arith.subf %86, %89 : vector<8x8xf32>
    %91 = math.exp %90 : vector<8x8xf32>
    %cst_33 = arith.constant dense<0.000000e+00> : vector<8xf32>
    %92 = vector.multi_reduction <add>, %91, %cst_33 [1] : vector<8x8xf32> to vector<8xf32>
    %93 = vector.shape_cast %92 : vector<8xf32> to vector<8x1xf32>
    %94 = tpu.reciprocal %93 {approx = true} : vector<8x1xf32> -> vector<8x1xf32>
    %95 = vector.broadcast %94 : vector<8x1xf32> to vector<8x8xf32>
    %96 = arith.mulf %91, %95 : vector<8x8xf32>
    %97 = arith.truncf %96 : vector<8x8xf32> to vector<8x8xbf16>
    %cst_34 = arith.constant dense<0.000000e+00> : vector<8x8xf32>
    %98 = tpu.matmul %97, %79, %cst_34 {dimension_numbers = #tpu.dot_dimension_numbers<[1], [0], [0], [1], [0, 0, 1, 1], [], []>} : vector<8x8xbf16>, vector<8x8xbf16>, vector<8x8xf32> -> vector<8x8xf32>
    %99 = vector.extract_strided_slice %15 {offsets = [0, 24], sizes = [8, 8], strides = [1, 1]} : vector<8x32xf32> to vector<8x8xf32>
    %100 = arith.truncf %99 : vector<8x8xf32> to vector<8x8xbf16>
    %101 = vector.extract_strided_slice %22 {offsets = [0, 24], sizes = [8, 8], strides = [1, 1]} : vector<8x32xf32> to vector<8x8xf32>
    %102 = arith.truncf %101 : vector<8x8xf32> to vector<8x8xbf16>
    %103 = vector.extract_strided_slice %23 {offsets = [0, 24], sizes = [8, 8], strides = [1, 1]} : vector<8x32xf32> to vector<8x8xf32>
    %104 = arith.truncf %103 : vector<8x8xf32> to vector<8x8xbf16>
    %cst_35 = arith.constant dense<0.000000e+00> : vector<8x8xf32>
    %105 = tpu.matmul %100, %102, %cst_35 {dimension_numbers = #tpu.dot_dimension_numbers<[1], [1], [0], [0], [0, 0, 1, 0], [], []>} : vector<8x8xbf16>, vector<8x8xbf16>, vector<8x8xf32> -> vector<8x8xf32>
    %cst_36 = arith.constant 0.353553385 : f32
    %106 = vector.broadcast %cst_36 : f32 to vector<8x8xf32>
    %107 = arith.mulf %105, %106 : vector<8x8xf32>
    %cst_37 = arith.constant 0.000000e+00 : f32
    %108 = vector.broadcast %cst_37 : f32 to vector<8x8xf32>
    %109 = arith.cmpf oeq, %3, %108 : vector<8x8xf32>
    %cst_38 = arith.constant -1.000000e+09 : f32
    %110 = vector.broadcast %cst_38 : f32 to vector<8x8xf32>
    %111 = arith.select %109, %110, %107 : vector<8x8xi1>, vector<8x8xf32>
    %cst_39 = arith.constant dense<0xFF800000> : vector<8xf32>
    %112 = vector.multi_reduction <maximumf>, %111, %cst_39 [1] : vector<8x8xf32> to vector<8xf32>
    %113 = vector.shape_cast %112 : vector<8xf32> to vector<8x1xf32>
    %114 = vector.broadcast %113 : vector<8x1xf32> to vector<8x8xf32>
    %115 = arith.subf %111, %114 : vector<8x8xf32>
    %116 = math.exp %115 : vector<8x8xf32>
    %cst_40 = arith.constant dense<0.000000e+00> : vector<8xf32>
    %117 = vector.multi_reduction <add>, %116, %cst_40 [1] : vector<8x8xf32> to vector<8xf32>
    %118 = vector.shape_cast %117 : vector<8xf32> to vector<8x1xf32>
    %119 = tpu.reciprocal %118 {approx = true} : vector<8x1xf32> -> vector<8x1xf32>
    %120 = vector.broadcast %119 : vector<8x1xf32> to vector<8x8xf32>
    %121 = arith.mulf %116, %120 : vector<8x8xf32>
    %122 = arith.truncf %121 : vector<8x8xf32> to vector<8x8xbf16>
    %cst_41 = arith.constant dense<0.000000e+00> : vector<8x8xf32>
    %123 = tpu.matmul %122, %104, %cst_41 {dimension_numbers = #tpu.dot_dimension_numbers<[1], [0], [0], [1], [0, 0, 1, 1], [], []>} : vector<8x8xbf16>, vector<8x8xbf16>, vector<8x8xf32> -> vector<8x8xf32>
    %124 = tpu.concatenate %48, %73, %98, %123 in 1 : vector<8x8xf32>, vector<8x8xf32>, vector<8x8xf32>, vector<8x8xf32> -> vector<8x32xf32>
    %125 = arith.truncf %124 : vector<8x32xf32> to vector<8x32xbf16>
    %c0_42 = arith.constant 0 : index
    %c0_43 = arith.constant 0 : index
    %126 = vector.load %arg6[%c0_42, %c0_43] : memref<32x32xf32, #tpu.memory_space<vmem>>, vector<32x32xf32>
    %127 = arith.truncf %126 : vector<32x32xf32> to vector<32x32xbf16>
    %cst_44 = arith.constant dense<0.000000e+00> : vector<8x32xf32>
    %128 = tpu.matmul %125, %127, %cst_44 {dimension_numbers = #tpu.dot_dimension_numbers<[1], [0], [0], [1], [0, 0, 1, 1], [], []>} : vector<8x32xbf16>, vector<32x32xbf16>, vector<8x32xf32> -> vector<8x32xf32>
    %c0_45 = arith.constant 0 : index
    %c0_46 = arith.constant 0 : index
    %129 = vector.load %arg7[%c0_45, %c0_46] : memref<1x32xf32, #tpu.memory_space<vmem>>, vector<1x32xf32>
    %130 = vector.broadcast %129 : vector<1x32xf32> to vector<8x32xf32>
    %131 = arith.addf %128, %130 : vector<8x32xf32>
    %132 = arith.addf %1, %131 : vector<8x32xf32>
    %c0_47 = arith.constant 0 : index
    %c0_48 = arith.constant 0 : index
    %133 = vector.load %arg8[%c0_47, %c0_48] : memref<1x32xf32, #tpu.memory_space<vmem>>, vector<1x32xf32>
    %c0_49 = arith.constant 0 : index
    %c0_50 = arith.constant 0 : index
    %134 = vector.load %arg9[%c0_49, %c0_50] : memref<1x32xf32, #tpu.memory_space<vmem>>, vector<1x32xf32>
    %cst_51 = arith.constant dense<0.000000e+00> : vector<8xf32>
    %135 = vector.multi_reduction <add>, %132, %cst_51 [1] : vector<8x32xf32> to vector<8xf32>
    %136 = vector.shape_cast %135 : vector<8xf32> to vector<8x1xf32>
    %cst_52 = arith.constant 3.200000e+01 : f32
    %137 = vector.broadcast %cst_52 : f32 to vector<8x1xf32>
    %138 = arith.divf %136, %137 : vector<8x1xf32>
    %139 = vector.broadcast %138 : vector<8x1xf32> to vector<8x32xf32>
    %140 = arith.subf %132, %139 : vector<8x32xf32>
    %141 = arith.mulf %140, %140 : vector<8x32xf32>
    %cst_53 = arith.constant dense<0.000000e+00> : vector<8xf32>
    %142 = vector.multi_reduction <add>, %141, %cst_53 [1] : vector<8x32xf32> to vector<8xf32>
    %143 = vector.shape_cast %142 : vector<8xf32> to vector<8x1xf32>
    %cst_54 = arith.constant 3.200000e+01 : f32
    %144 = vector.broadcast %cst_54 : f32 to vector<8x1xf32>
    %145 = arith.divf %143, %144 : vector<8x1xf32>
    %146 = vector.broadcast %138 : vector<8x1xf32> to vector<8x32xf32>
    %147 = arith.subf %132, %146 : vector<8x32xf32>
    %cst_55 = arith.constant 9.99999996E-13 : f32
    %148 = vector.broadcast %cst_55 : f32 to vector<8x1xf32>
    %149 = arith.addf %145, %148 : vector<8x1xf32>
    %150 = math.rsqrt %149 : vector<8x1xf32>
    %151 = vector.broadcast %150 : vector<8x1xf32> to vector<8x32xf32>
    %152 = arith.mulf %147, %151 : vector<8x32xf32>
    %153 = vector.broadcast %133 : vector<1x32xf32> to vector<8x32xf32>
    %154 = arith.mulf %152, %153 : vector<8x32xf32>
    %155 = vector.broadcast %134 : vector<1x32xf32> to vector<8x32xf32>
    %156 = arith.addf %154, %155 : vector<8x32xf32>
    %c0_56 = arith.constant 0 : index
    %c0_57 = arith.constant 0 : index
    %c0_58 = arith.constant 0 : index
    %157 = vector.load %arg10[%c0_56, %c0_57, %c0_58] : memref<1x8x32xf32, #tpu.memory_space<vmem>>, vector<1x8x32xf32>
    %158 = vector.shape_cast %157 : vector<1x8x32xf32> to vector<8x32xf32>
    %159 = vector.shape_cast %156 : vector<8x32xf32> to vector<1x8x32xf32>
    tpu.vector_store %arg10[%c0_56, %c0_57, %c0_58], %159 {strides = array<i32>} : memref<1x8x32xf32, #tpu.memory_space<vmem>>, vector<1x8x32xf32>,
    return
  }
  func.func @transform_0(%arg0: i32) -> (i32, i32, i32) {
    %c0_i32 = arith.constant 0 : i32
    %c0_i32_0 = arith.constant 0 : i32
    %c0_i32_1 = arith.constant 0 : i32
    return %arg0, %c0_i32, %c0_i32_0 : i32, i32, i32
  }
  func.func @transform_1(%arg0: i32) -> (i32, i32, i32) {
    %c0_i32 = arith.constant 0 : i32
    %c0_i32_0 = arith.constant 0 : i32
    %c0_i32_1 = arith.constant 0 : i32
    return %arg0, %c0_i32, %c0_i32_0 : i32, i32, i32
  }
  func.func @transform_2(%arg0: i32) -> (i32, i32, i32, i32) {
    %c0_i32 = arith.constant 0 : i32
    %c0_i32_0 = arith.constant 0 : i32
    %c0_i32_1 = arith.constant 0 : i32
    %c0_i32_2 = arith.constant 0 : i32
    return %arg0, %c0_i32, %c0_i32_0, %c0_i32_1 : i32, i32, i32, i32
  }
  func.func @transform_3(%arg0: i32) -> (i32, i32) {
    %c0_i32 = arith.constant 0 : i32
    %c0_i32_0 = arith.constant 0 : i32
    %c0_i32_1 = arith.constant 0 : i32
    return %c0_i32, %c0_i32_0 : i32, i32
  }
  func.func @transform_4(%arg0: i32) -> (i32, i32) {
    %c0_i32 = arith.constant 0 : i32
    %c0_i32_0 = arith.constant 0 : i32
    %c0_i32_1 = arith.constant 0 : i32
    return %c0_i32, %c0_i32_0 : i32, i32
  }
  func.func @transform_5(%arg0: i32) -> (i32, i32) {
    %c0_i32 = arith.constant 0 : i32
    %c0_i32_0 = arith.constant 0 : i32
    %c0_i32_1 = arith.constant 0 : i32
    return %c0_i32, %c0_i32_0 : i32, i32
  }
  func.func @transform_6(%arg0: i32) -> (i32, i32) {
    %c0_i32 = arith.constant 0 : i32
    %c0_i32_0 = arith.constant 0 : i32
    %c0_i32_1 = arith.constant 0 : i32
    return %c0_i32, %c0_i32_0 : i32, i32
  }
  func.func @transform_7(%arg0: i32) -> (i32, i32) {
    %c0_i32 = arith.constant 0 : i32
    %c0_i32_0 = arith.constant 0 : i32
    %c0_i32_1 = arith.constant 0 : i32
    return %c0_i32, %c0_i32_0 : i32, i32
  }
  func.func @transform_8(%arg0: i32) -> (i32, i32) {
    %c0_i32 = arith.constant 0 : i32
    %c0_i32_0 = arith.constant 0 : i32
    %c0_i32_1 = arith.constant 0 : i32
    return %c0_i32, %c0_i32_0 : i32, i32
  }
  func.func @transform_9(%arg0: i32) -> (i32, i32, i32) {
    %c0_i32 = arith.constant 0 : i32
    %c0_i32_0 = arith.constant 0 : i32
    %c0_i32_1 = arith.constant 0 : i32
    return %arg0, %c0_i32, %c0_i32_0 : i32, i32, i32
  }
}

module attributes {stable_mosaic.version = 11 : i64} {
  func.func @_mha_add_ln_kernel(%arg0: i32, %arg1: memref<1x8x32xf32, #tpu.memory_space<vmem>>, %arg2: memref<1x1x8x8xf32, #tpu.memory_space<vmem>>, %arg3: memref<32x96xf32, #tpu.memory_space<vmem>>, %arg4: memref<1x96xf32, #tpu.memory_space<vmem>>, %arg5: memref<32x32xf32, #tpu.memory_space<vmem>>, %arg6: memref<1x32xf32, #tpu.memory_space<vmem>>, %arg7: memref<1x32xf32, #tpu.memory_space<vmem>>, %arg8: memref<1x32xf32, #tpu.memory_space<vmem>>, %arg9: memref<1x8x32xf32, #tpu.memory_space<vmem>>) attributes {dimension_semantics = [#tpu.dimension_semantics<parallel>], iteration_bounds = array<i64: 2>, scalar_prefetch = 0 : i64, scratch_operands = 0 : i64, tpu.core_type = #tpu.core_type<tc>, window_params = [{transform_indices = @transform_0, window_bounds = array<i64: 1, 8, 32>}, {transform_indices = @transform_1, window_bounds = array<i64: 1, 1, 8, 8>}, {pipeline_mode = #tpu.pipeline_mode<synchronous>, transform_indices = @transform_2, window_bounds = array<i64: 32, 96>}, {pipeline_mode = #tpu.pipeline_mode<synchronous>, transform_indices = @transform_3, window_bounds = array<i64: 1, 96>}, {pipeline_mode = #tpu.pipeline_mode<synchronous>, transform_indices = @transform_4, window_bounds = array<i64: 32, 32>}, {pipeline_mode = #tpu.pipeline_mode<synchronous>, transform_indices = @transform_5, window_bounds = array<i64: 1, 32>}, {pipeline_mode = #tpu.pipeline_mode<synchronous>, transform_indices = @transform_6, window_bounds = array<i64: 1, 32>}, {pipeline_mode = #tpu.pipeline_mode<synchronous>, transform_indices = @transform_7, window_bounds = array<i64: 1, 32>}, {transform_indices = @transform_8, window_bounds = array<i64: 1, 8, 32>}]} {
    %c0 = arith.constant 0 : index
    %c0_0 = arith.constant 0 : index
    %c0_1 = arith.constant 0 : index
    %0 = vector.load %arg1[%c0, %c0_0, %c0_1] : memref<1x8x32xf32, #tpu.memory_space<vmem>>, vector<1x8x32xf32>
    %1 = vector.shape_cast %0 : vector<1x8x32xf32> to vector<8x32xf32>
    %c0_2 = arith.constant 0 : index
    %c0_3 = arith.constant 0 : index
    %c0_4 = arith.constant 0 : index
    %c0_5 = arith.constant 0 : index
    %2 = vector.load %arg2[%c0_2, %c0_3, %c0_4, %c0_5] : memref<1x1x8x8xf32, #tpu.memory_space<vmem>>, vector<1x1x8x8xf32>
    %3 = vector.shape_cast %2 : vector<1x1x8x8xf32> to vector<8x8xf32>
    %c0_6 = arith.constant 0 : index
    %c0_7 = arith.constant 0 : index
    %4 = vector.load %arg3[%c0_6, %c0_7] : memref<32x96xf32, #tpu.memory_space<vmem>>, vector<32x96xf32>
    %c0_8 = arith.constant 0 : index
    %c0_9 = arith.constant 0 : index
    %5 = vector.load %arg4[%c0_8, %c0_9] : memref<1x96xf32, #tpu.memory_space<vmem>>, vector<1x96xf32>
    %6 = arith.truncf %1 : vector<8x32xf32> to vector<8x32xbf16>
    %7 = arith.truncf %4 : vector<32x96xf32> to vector<32x96xbf16>
    %cst = arith.constant dense<0.000000e+00> : vector<8x96xf32>
    %8 = tpu.matmul %6, %7, %cst {dimension_numbers = #tpu.dot_dimension_numbers<[1], [0], [0], [1], [0, 0, 1, 1], [], []>} : vector<8x32xbf16>, vector<32x96xbf16>, vector<8x96xf32> -> vector<8x96xf32>
    %9 = vector.broadcast %5 : vector<1x96xf32> to vector<8x96xf32>
    %10 = arith.addf %8, %9 : vector<8x96xf32>
    %11 = vector.extract_strided_slice %10 {offsets = [0, 0], sizes = [8, 32], strides = [1, 1]} : vector<8x96xf32> to vector<8x32xf32>
    %12 = vector.extract_strided_slice %10 {offsets = [0, 32], sizes = [8, 32], strides = [1, 1]} : vector<8x96xf32> to vector<8x32xf32>
    %13 = vector.extract_strided_slice %10 {offsets = [0, 64], sizes = [8, 32], strides = [1, 1]} : vector<8x96xf32> to vector<8x32xf32>
    %14 = vector.extract_strided_slice %11 {offsets = [0, 0], sizes = [8, 8], strides = [1, 1]} : vector<8x32xf32> to vector<8x8xf32>
    %15 = arith.truncf %14 : vector<8x8xf32> to vector<8x8xbf16>
    %16 = vector.extract_strided_slice %12 {offsets = [0, 0], sizes = [8, 8], strides = [1, 1]} : vector<8x32xf32> to vector<8x8xf32>
    %17 = arith.truncf %16 : vector<8x8xf32> to vector<8x8xbf16>
    %18 = vector.extract_strided_slice %13 {offsets = [0, 0], sizes = [8, 8], strides = [1, 1]} : vector<8x32xf32> to vector<8x8xf32>
    %19 = arith.truncf %18 : vector<8x8xf32> to vector<8x8xbf16>
    %cst_10 = arith.constant dense<0.000000e+00> : vector<8x8xf32>
    %20 = tpu.matmul %15, %17, %cst_10 {dimension_numbers = #tpu.dot_dimension_numbers<[1], [1], [0], [0], [0, 0, 1, 0], [], []>} : vector<8x8xbf16>, vector<8x8xbf16>, vector<8x8xf32> -> vector<8x8xf32>
    %cst_11 = arith.constant 0.353553385 : f32
    %21 = vector.broadcast %cst_11 : f32 to vector<8x8xf32>
    %22 = arith.mulf %20, %21 : vector<8x8xf32>
    %cst_12 = arith.constant 0.000000e+00 : f32
    %23 = vector.broadcast %cst_12 : f32 to vector<8x8xf32>
    %24 = arith.cmpf oeq, %3, %23 : vector<8x8xf32>
    %cst_13 = arith.constant -1.000000e+09 : f32
    %25 = vector.broadcast %cst_13 : f32 to vector<8x8xf32>
    %26 = arith.select %24, %25, %22 : vector<8x8xi1>, vector<8x8xf32>
    %cst_14 = arith.constant dense<0xFF800000> : vector<8xf32>
    %27 = vector.multi_reduction <maximumf>, %26, %cst_14 [1] : vector<8x8xf32> to vector<8xf32>
    %28 = vector.shape_cast %27 : vector<8xf32> to vector<8x1xf32>
    %29 = vector.broadcast %28 : vector<8x1xf32> to vector<8x8xf32>
    %30 = arith.subf %26, %29 : vector<8x8xf32>
    %31 = math.exp %30 : vector<8x8xf32>
    %cst_15 = arith.constant dense<0.000000e+00> : vector<8xf32>
    %32 = vector.multi_reduction <add>, %31, %cst_15 [1] : vector<8x8xf32> to vector<8xf32>
    %33 = vector.shape_cast %32 : vector<8xf32> to vector<8x1xf32>
    %34 = tpu.reciprocal %33 {approx = true} : vector<8x1xf32> -> vector<8x1xf32>
    %35 = vector.broadcast %34 : vector<8x1xf32> to vector<8x8xf32>
    %36 = arith.mulf %31, %35 : vector<8x8xf32>
    %37 = arith.truncf %36 : vector<8x8xf32> to vector<8x8xbf16>
    %cst_16 = arith.constant dense<0.000000e+00> : vector<8x8xf32>
    %38 = tpu.matmul %37, %19, %cst_16 {dimension_numbers = #tpu.dot_dimension_numbers<[1], [0], [0], [1], [0, 0, 1, 1], [], []>} : vector<8x8xbf16>, vector<8x8xbf16>, vector<8x8xf32> -> vector<8x8xf32>
    %39 = vector.extract_strided_slice %11 {offsets = [0, 8], sizes = [8, 8], strides = [1, 1]} : vector<8x32xf32> to vector<8x8xf32>
    %40 = arith.truncf %39 : vector<8x8xf32> to vector<8x8xbf16>
    %41 = vector.extract_strided_slice %12 {offsets = [0, 8], sizes = [8, 8], strides = [1, 1]} : vector<8x32xf32> to vector<8x8xf32>
    %42 = arith.truncf %41 : vector<8x8xf32> to vector<8x8xbf16>
    %43 = vector.extract_strided_slice %13 {offsets = [0, 8], sizes = [8, 8], strides = [1, 1]} : vector<8x32xf32> to vector<8x8xf32>
    %44 = arith.truncf %43 : vector<8x8xf32> to vector<8x8xbf16>
    %cst_17 = arith.constant dense<0.000000e+00> : vector<8x8xf32>
    %45 = tpu.matmul %40, %42, %cst_17 {dimension_numbers = #tpu.dot_dimension_numbers<[1], [1], [0], [0], [0, 0, 1, 0], [], []>} : vector<8x8xbf16>, vector<8x8xbf16>, vector<8x8xf32> -> vector<8x8xf32>
    %cst_18 = arith.constant 0.353553385 : f32
    %46 = vector.broadcast %cst_18 : f32 to vector<8x8xf32>
    %47 = arith.mulf %45, %46 : vector<8x8xf32>
    %cst_19 = arith.constant 0.000000e+00 : f32
    %48 = vector.broadcast %cst_19 : f32 to vector<8x8xf32>
    %49 = arith.cmpf oeq, %3, %48 : vector<8x8xf32>
    %cst_20 = arith.constant -1.000000e+09 : f32
    %50 = vector.broadcast %cst_20 : f32 to vector<8x8xf32>
    %51 = arith.select %49, %50, %47 : vector<8x8xi1>, vector<8x8xf32>
    %cst_21 = arith.constant dense<0xFF800000> : vector<8xf32>
    %52 = vector.multi_reduction <maximumf>, %51, %cst_21 [1] : vector<8x8xf32> to vector<8xf32>
    %53 = vector.shape_cast %52 : vector<8xf32> to vector<8x1xf32>
    %54 = vector.broadcast %53 : vector<8x1xf32> to vector<8x8xf32>
    %55 = arith.subf %51, %54 : vector<8x8xf32>
    %56 = math.exp %55 : vector<8x8xf32>
    %cst_22 = arith.constant dense<0.000000e+00> : vector<8xf32>
    %57 = vector.multi_reduction <add>, %56, %cst_22 [1] : vector<8x8xf32> to vector<8xf32>
    %58 = vector.shape_cast %57 : vector<8xf32> to vector<8x1xf32>
    %59 = tpu.reciprocal %58 {approx = true} : vector<8x1xf32> -> vector<8x1xf32>
    %60 = vector.broadcast %59 : vector<8x1xf32> to vector<8x8xf32>
    %61 = arith.mulf %56, %60 : vector<8x8xf32>
    %62 = arith.truncf %61 : vector<8x8xf32> to vector<8x8xbf16>
    %cst_23 = arith.constant dense<0.000000e+00> : vector<8x8xf32>
    %63 = tpu.matmul %62, %44, %cst_23 {dimension_numbers = #tpu.dot_dimension_numbers<[1], [0], [0], [1], [0, 0, 1, 1], [], []>} : vector<8x8xbf16>, vector<8x8xbf16>, vector<8x8xf32> -> vector<8x8xf32>
    %64 = vector.extract_strided_slice %11 {offsets = [0, 16], sizes = [8, 8], strides = [1, 1]} : vector<8x32xf32> to vector<8x8xf32>
    %65 = arith.truncf %64 : vector<8x8xf32> to vector<8x8xbf16>
    %66 = vector.extract_strided_slice %12 {offsets = [0, 16], sizes = [8, 8], strides = [1, 1]} : vector<8x32xf32> to vector<8x8xf32>
    %67 = arith.truncf %66 : vector<8x8xf32> to vector<8x8xbf16>
    %68 = vector.extract_strided_slice %13 {offsets = [0, 16], sizes = [8, 8], strides = [1, 1]} : vector<8x32xf32> to vector<8x8xf32>
    %69 = arith.truncf %68 : vector<8x8xf32> to vector<8x8xbf16>
    %cst_24 = arith.constant dense<0.000000e+00> : vector<8x8xf32>
    %70 = tpu.matmul %65, %67, %cst_24 {dimension_numbers = #tpu.dot_dimension_numbers<[1], [1], [0], [0], [0, 0, 1, 0], [], []>} : vector<8x8xbf16>, vector<8x8xbf16>, vector<8x8xf32> -> vector<8x8xf32>
    %cst_25 = arith.constant 0.353553385 : f32
    %71 = vector.broadcast %cst_25 : f32 to vector<8x8xf32>
    %72 = arith.mulf %70, %71 : vector<8x8xf32>
    %cst_26 = arith.constant 0.000000e+00 : f32
    %73 = vector.broadcast %cst_26 : f32 to vector<8x8xf32>
    %74 = arith.cmpf oeq, %3, %73 : vector<8x8xf32>
    %cst_27 = arith.constant -1.000000e+09 : f32
    %75 = vector.broadcast %cst_27 : f32 to vector<8x8xf32>
    %76 = arith.select %74, %75, %72 : vector<8x8xi1>, vector<8x8xf32>
    %cst_28 = arith.constant dense<0xFF800000> : vector<8xf32>
    %77 = vector.multi_reduction <maximumf>, %76, %cst_28 [1] : vector<8x8xf32> to vector<8xf32>
    %78 = vector.shape_cast %77 : vector<8xf32> to vector<8x1xf32>
    %79 = vector.broadcast %78 : vector<8x1xf32> to vector<8x8xf32>
    %80 = arith.subf %76, %79 : vector<8x8xf32>
    %81 = math.exp %80 : vector<8x8xf32>
    %cst_29 = arith.constant dense<0.000000e+00> : vector<8xf32>
    %82 = vector.multi_reduction <add>, %81, %cst_29 [1] : vector<8x8xf32> to vector<8xf32>
    %83 = vector.shape_cast %82 : vector<8xf32> to vector<8x1xf32>
    %84 = tpu.reciprocal %83 {approx = true} : vector<8x1xf32> -> vector<8x1xf32>
    %85 = vector.broadcast %84 : vector<8x1xf32> to vector<8x8xf32>
    %86 = arith.mulf %81, %85 : vector<8x8xf32>
    %87 = arith.truncf %86 : vector<8x8xf32> to vector<8x8xbf16>
    %cst_30 = arith.constant dense<0.000000e+00> : vector<8x8xf32>
    %88 = tpu.matmul %87, %69, %cst_30 {dimension_numbers = #tpu.dot_dimension_numbers<[1], [0], [0], [1], [0, 0, 1, 1], [], []>} : vector<8x8xbf16>, vector<8x8xbf16>, vector<8x8xf32> -> vector<8x8xf32>
    %89 = vector.extract_strided_slice %11 {offsets = [0, 24], sizes = [8, 8], strides = [1, 1]} : vector<8x32xf32> to vector<8x8xf32>
    %90 = arith.truncf %89 : vector<8x8xf32> to vector<8x8xbf16>
    %91 = vector.extract_strided_slice %12 {offsets = [0, 24], sizes = [8, 8], strides = [1, 1]} : vector<8x32xf32> to vector<8x8xf32>
    %92 = arith.truncf %91 : vector<8x8xf32> to vector<8x8xbf16>
    %93 = vector.extract_strided_slice %13 {offsets = [0, 24], sizes = [8, 8], strides = [1, 1]} : vector<8x32xf32> to vector<8x8xf32>
    %94 = arith.truncf %93 : vector<8x8xf32> to vector<8x8xbf16>
    %cst_31 = arith.constant dense<0.000000e+00> : vector<8x8xf32>
    %95 = tpu.matmul %90, %92, %cst_31 {dimension_numbers = #tpu.dot_dimension_numbers<[1], [1], [0], [0], [0, 0, 1, 0], [], []>} : vector<8x8xbf16>, vector<8x8xbf16>, vector<8x8xf32> -> vector<8x8xf32>
    %cst_32 = arith.constant 0.353553385 : f32
    %96 = vector.broadcast %cst_32 : f32 to vector<8x8xf32>
    %97 = arith.mulf %95, %96 : vector<8x8xf32>
    %cst_33 = arith.constant 0.000000e+00 : f32
    %98 = vector.broadcast %cst_33 : f32 to vector<8x8xf32>
    %99 = arith.cmpf oeq, %3, %98 : vector<8x8xf32>
    %cst_34 = arith.constant -1.000000e+09 : f32
    %100 = vector.broadcast %cst_34 : f32 to vector<8x8xf32>
    %101 = arith.select %99, %100, %97 : vector<8x8xi1>, vector<8x8xf32>
    %cst_35 = arith.constant dense<0xFF800000> : vector<8xf32>
    %102 = vector.multi_reduction <maximumf>, %101, %cst_35 [1] : vector<8x8xf32> to vector<8xf32>
    %103 = vector.shape_cast %102 : vector<8xf32> to vector<8x1xf32>
    %104 = vector.broadcast %103 : vector<8x1xf32> to vector<8x8xf32>
    %105 = arith.subf %101, %104 : vector<8x8xf32>
    %106 = math.exp %105 : vector<8x8xf32>
    %cst_36 = arith.constant dense<0.000000e+00> : vector<8xf32>
    %107 = vector.multi_reduction <add>, %106, %cst_36 [1] : vector<8x8xf32> to vector<8xf32>
    %108 = vector.shape_cast %107 : vector<8xf32> to vector<8x1xf32>
    %109 = tpu.reciprocal %108 {approx = true} : vector<8x1xf32> -> vector<8x1xf32>
    %110 = vector.broadcast %109 : vector<8x1xf32> to vector<8x8xf32>
    %111 = arith.mulf %106, %110 : vector<8x8xf32>
    %112 = arith.truncf %111 : vector<8x8xf32> to vector<8x8xbf16>
    %cst_37 = arith.constant dense<0.000000e+00> : vector<8x8xf32>
    %113 = tpu.matmul %112, %94, %cst_37 {dimension_numbers = #tpu.dot_dimension_numbers<[1], [0], [0], [1], [0, 0, 1, 1], [], []>} : vector<8x8xbf16>, vector<8x8xbf16>, vector<8x8xf32> -> vector<8x8xf32>
    %114 = tpu.concatenate %38, %63, %88, %113 in 1 : vector<8x8xf32>, vector<8x8xf32>, vector<8x8xf32>, vector<8x8xf32> -> vector<8x32xf32>
    %115 = arith.truncf %114 : vector<8x32xf32> to vector<8x32xbf16>
    %c0_38 = arith.constant 0 : index
    %c0_39 = arith.constant 0 : index
    %116 = vector.load %arg5[%c0_38, %c0_39] : memref<32x32xf32, #tpu.memory_space<vmem>>, vector<32x32xf32>
    %117 = arith.truncf %116 : vector<32x32xf32> to vector<32x32xbf16>
    %cst_40 = arith.constant dense<0.000000e+00> : vector<8x32xf32>
    %118 = tpu.matmul %115, %117, %cst_40 {dimension_numbers = #tpu.dot_dimension_numbers<[1], [0], [0], [1], [0, 0, 1, 1], [], []>} : vector<8x32xbf16>, vector<32x32xbf16>, vector<8x32xf32> -> vector<8x32xf32>
    %c0_41 = arith.constant 0 : index
    %c0_42 = arith.constant 0 : index
    %119 = vector.load %arg6[%c0_41, %c0_42] : memref<1x32xf32, #tpu.memory_space<vmem>>, vector<1x32xf32>
    %120 = vector.broadcast %119 : vector<1x32xf32> to vector<8x32xf32>
    %121 = arith.addf %118, %120 : vector<8x32xf32>
    %122 = arith.addf %1, %121 : vector<8x32xf32>
    %c0_43 = arith.constant 0 : index
    %c0_44 = arith.constant 0 : index
    %123 = vector.load %arg7[%c0_43, %c0_44] : memref<1x32xf32, #tpu.memory_space<vmem>>, vector<1x32xf32>
    %c0_45 = arith.constant 0 : index
    %c0_46 = arith.constant 0 : index
    %124 = vector.load %arg8[%c0_45, %c0_46] : memref<1x32xf32, #tpu.memory_space<vmem>>, vector<1x32xf32>
    %cst_47 = arith.constant dense<0.000000e+00> : vector<8xf32>
    %125 = vector.multi_reduction <add>, %122, %cst_47 [1] : vector<8x32xf32> to vector<8xf32>
    %126 = vector.shape_cast %125 : vector<8xf32> to vector<8x1xf32>
    %cst_48 = arith.constant 3.200000e+01 : f32
    %127 = vector.broadcast %cst_48 : f32 to vector<8x1xf32>
    %128 = arith.divf %126, %127 : vector<8x1xf32>
    %129 = vector.broadcast %128 : vector<8x1xf32> to vector<8x32xf32>
    %130 = arith.subf %122, %129 : vector<8x32xf32>
    %131 = arith.mulf %130, %130 : vector<8x32xf32>
    %cst_49 = arith.constant dense<0.000000e+00> : vector<8xf32>
    %132 = vector.multi_reduction <add>, %131, %cst_49 [1] : vector<8x32xf32> to vector<8xf32>
    %133 = vector.shape_cast %132 : vector<8xf32> to vector<8x1xf32>
    %cst_50 = arith.constant 3.200000e+01 : f32
    %134 = vector.broadcast %cst_50 : f32 to vector<8x1xf32>
    %135 = arith.divf %133, %134 : vector<8x1xf32>
    %136 = vector.broadcast %128 : vector<8x1xf32> to vector<8x32xf32>
    %137 = arith.subf %122, %136 : vector<8x32xf32>
    %cst_51 = arith.constant 9.99999996E-13 : f32
    %138 = vector.broadcast %cst_51 : f32 to vector<8x1xf32>
    %139 = arith.addf %135, %138 : vector<8x1xf32>
    %140 = math.rsqrt %139 : vector<8x1xf32>
    %141 = vector.broadcast %140 : vector<8x1xf32> to vector<8x32xf32>
    %142 = arith.mulf %137, %141 : vector<8x32xf32>
    %143 = vector.broadcast %123 : vector<1x32xf32> to vector<8x32xf32>
    %144 = arith.mulf %142, %143 : vector<8x32xf32>
    %145 = vector.broadcast %124 : vector<1x32xf32> to vector<8x32xf32>
    %146 = arith.addf %144, %145 : vector<8x32xf32>
    %c0_52 = arith.constant 0 : index
    %c0_53 = arith.constant 0 : index
    %c0_54 = arith.constant 0 : index
    %147 = vector.load %arg9[%c0_52, %c0_53, %c0_54] : memref<1x8x32xf32, #tpu.memory_space<vmem>>, vector<1x8x32xf32>
    %148 = vector.shape_cast %147 : vector<1x8x32xf32> to vector<8x32xf32>
    %149 = vector.shape_cast %146 : vector<8x32xf32> to vector<1x8x32xf32>
    tpu.vector_store %arg9[%c0_52, %c0_53, %c0_54], %149 {strides = array<i32>} : memref<1x8x32xf32, #tpu.memory_space<vmem>>, vector<1x8x32xf32>,
    return
  }
  func.func @transform_0(%arg0: i32) -> (i32, i32, i32) {
    %c0_i32 = arith.constant 0 : i32
    %c0_i32_0 = arith.constant 0 : i32
    %c0_i32_1 = arith.constant 0 : i32
    return %arg0, %c0_i32, %c0_i32_0 : i32, i32, i32
  }
  func.func @transform_1(%arg0: i32) -> (i32, i32, i32, i32) {
    %c0_i32 = arith.constant 0 : i32
    %c0_i32_0 = arith.constant 0 : i32
    %c0_i32_1 = arith.constant 0 : i32
    %c0_i32_2 = arith.constant 0 : i32
    return %arg0, %c0_i32, %c0_i32_0, %c0_i32_1 : i32, i32, i32, i32
  }
  func.func @transform_2(%arg0: i32) -> (i32, i32) {
    %c0_i32 = arith.constant 0 : i32
    %c0_i32_0 = arith.constant 0 : i32
    %c0_i32_1 = arith.constant 0 : i32
    return %c0_i32, %c0_i32_0 : i32, i32
  }
  func.func @transform_3(%arg0: i32) -> (i32, i32) {
    %c0_i32 = arith.constant 0 : i32
    %c0_i32_0 = arith.constant 0 : i32
    %c0_i32_1 = arith.constant 0 : i32
    return %c0_i32, %c0_i32_0 : i32, i32
  }
  func.func @transform_4(%arg0: i32) -> (i32, i32) {
    %c0_i32 = arith.constant 0 : i32
    %c0_i32_0 = arith.constant 0 : i32
    %c0_i32_1 = arith.constant 0 : i32
    return %c0_i32, %c0_i32_0 : i32, i32
  }
  func.func @transform_5(%arg0: i32) -> (i32, i32) {
    %c0_i32 = arith.constant 0 : i32
    %c0_i32_0 = arith.constant 0 : i32
    %c0_i32_1 = arith.constant 0 : i32
    return %c0_i32, %c0_i32_0 : i32, i32
  }
  func.func @transform_6(%arg0: i32) -> (i32, i32) {
    %c0_i32 = arith.constant 0 : i32
    %c0_i32_0 = arith.constant 0 : i32
    %c0_i32_1 = arith.constant 0 : i32
    return %c0_i32, %c0_i32_0 : i32, i32
  }
  func.func @transform_7(%arg0: i32) -> (i32, i32) {
    %c0_i32 = arith.constant 0 : i32
    %c0_i32_0 = arith.constant 0 : i32
    %c0_i32_1 = arith.constant 0 : i32
    return %c0_i32, %c0_i32_0 : i32, i32
  }
  func.func @transform_8(%arg0: i32) -> (i32, i32, i32) {
    %c0_i32 = arith.constant 0 : i32
    %c0_i32_0 = arith.constant 0 : i32
    %c0_i32_1 = arith.constant 0 : i32
    return %arg0, %c0_i32, %c0_i32_0 : i32, i32, i32
  }
}

</mosaic_0001>

<llo_original>
// kernel: decoder_layer.5
$region0: #{decoder_layer.5}
  #allocation0 [shape = 'u32[]', space=smem, size = 0x4, offset = 0x4, fixed_abs, tag = 'smem constant byte address 0x4 - core index']
  #allocation1 [shape = 'u32[72,128]{1,0:T(1,128)}', space=vmem, size = 0x9000, scoped, tag = 'internal scratch']
  %s0 = inlined_call_operand.vmem [shape: f32[16,32], index: 0, kind: input, shape index: {}]
  %s1 = inlined_call_operand.vmem [shape: f32[32,64], index: 1, kind: input, shape index: {}]
  %s2 = inlined_call_operand.vmem [shape: f32[1,64], index: 2, kind: input, shape index: {}]
  %s3 = inlined_call_operand.vmem [shape: f32[64,32], index: 3, kind: input, shape index: {}]
  %s4 = inlined_call_operand.vmem [shape: f32[1,32], index: 4, kind: input, shape index: {}]
  %s5 = inlined_call_operand.vmem [shape: f32[1,32], index: 5, kind: input, shape index: {}]
  %s6 = inlined_call_operand.vmem [shape: f32[1,32], index: 6, kind: input, shape index: {}]
  %s7 = inlined_call_operand.hbm [shape: f32[16,32], index: 7, kind: output, shape index: {}]
  %s8 = sld [smem:[#allocation0]]
  $region38: #{decoder_layer.5} parent=0
    _
  %s10 = ssub.s32 1, %s8
  %s11 = scalar_select 0, %s10, %s8
  $region1: #{decoder_layer.5} parent=0
    #allocation2 [shape = 'u8[8192]{0}', space=vmem, size = 0x2000, scoped, tag = 'output window, operand 0, single buffered']
    #allocation3 [shape = 's32[1]{0}', space=sflag, size = 0x4, scoped, tag = 'scoped memory for decoder_layer.5']
    %12 = vsyncpa [#allocation3], 0
    // Predicated region
    $region2: #{decoder_layer.5} parent=1 // pred_check
      _
    $region3: #{decoder_layer.5} parent=1 // pred_check_branch
      %14 = sbr.rel (0) target = $region5
    $region4: #{decoder_layer.5} parent=1 // pred_region
      _
    $region5: #{decoder_layer.5} parent=1 // pred_fallthru
      _
    // Predicated region
    $region6: #{decoder_layer.5} parent=1 // pred_check
      _
    $region7: #{decoder_layer.5} parent=1 // pred_check_branch
      %16 = sbr.rel (0) target = $region9
    $region8: #{decoder_layer.5} parent=1 // pred_region
      _
    $region9: #{decoder_layer.5} parent=1 // pred_fallthru
      _
    // Predicated region
    $region10: #{decoder_layer.5} parent=1 // pred_check
      _
    $region11: #{decoder_layer.5} parent=1 // pred_check_branch
      %18 = sbr.rel (0) target = $region13
    $region12: #{decoder_layer.5} parent=1 // pred_region
      _
    $region13: #{decoder_layer.5} parent=1 // pred_fallthru
      _
    // Predicated region
    $region14: #{decoder_layer.5} parent=1 // pred_check
      _
    $region15: #{decoder_layer.5} parent=1 // pred_check_branch
      %20 = sbr.rel (0) target = $region17
    $region16: #{decoder_layer.5} parent=1 // pred_region
      _
    $region17: #{decoder_layer.5} parent=1 // pred_fallthru
      _
    // Predicated region
    $region18: #{decoder_layer.5} parent=1 // pred_check
      _
    $region19: #{decoder_layer.5} parent=1 // pred_check_branch
      %22 = sbr.rel (0) target = $region21
    $region20: #{decoder_layer.5} parent=1 // pred_region
      _
    $region21: #{decoder_layer.5} parent=1 // pred_fallthru
      _
    // Predicated region
    $region22: #{decoder_layer.5} parent=1 // pred_check
      _
    $region23: #{decoder_layer.5} parent=1 // pred_check_branch
      %24 = sbr.rel (0) target = $region25
    $region24: #{decoder_layer.5} parent=1 // pred_region
      _
    $region25: #{decoder_layer.5} parent=1 // pred_fallthru
      _
    // Predicated region
    $region26: #{decoder_layer.5} parent=1 // pred_check
      _
    $region27: #{decoder_layer.5} parent=1 // pred_check_branch
      %26 = sbr.rel (0) target = $region29
    $region28: #{decoder_layer.5} parent=1 // pred_region
      _
    $region29: #{decoder_layer.5} parent=1 // pred_fallthru
      _
    %v28 = vld [vmem:[%s0] sm:$0xff]
    %v29 = vld [vmem:[%s0 + $0x8] sm:$0xff]
    %v30 = vpack.c.bf16 %v29, %v28
    %v31 = vld [vmem:[%s1] sm:$0xff]
    %v32 = vld [vmem:[%s1 + $0x8] sm:$0xff]
    %v33 = vld [vmem:[%s1 + $0x10] sm:$0xff]
    %v34 = vld [vmem:[%s1 + $0x18] sm:$0xff]
    %v35 = vpack.c.bf16 %v32, %v31
    %v36 = vpack.c.bf16 %v34, %v33
    %v37 = vld [vmem:[%s2] sm:$0x1]
    %v39 = vperm.slane %v37, 0
    %vm41 = vcmask 261120
    %v43 = vsel %vm41, %v30, 0
    %45 = vmatpush.bf16.msra.mxu0 0
    %46 = vmatpush.bf16.msra.mxu0 0
    %47 = vmatpush.bf16.msra.mxu0 0
    %48 = vmatpush.bf16.msra.mxu0 0
    %49 = vmatpush.bf16.msra.mxu0 0
    %50 = vmatpush.bf16.msra.mxu0 0
    %51 = vmatpush.bf16.msra.mxu0 %v36
    %52 = vmatpush.bf16.msra.mxu0 %v35
    %53 = vmatmul.bf16.gmra.mxu0 %v43
    %v54 = vpop.f32.mrf.mxu0
    %v55 = vadd.f32 %v39, %v54
    %v56 = vpop.f32.mrf.mxu0
    %v57 = vadd.f32 %v39, %v56
    %58 = vdwg.mxu0
    %v59 = vmax.f32 %v55, 0.0
    %v60 = vmax.f32 %v57, 0.0
    %v61 = vpack.c.bf16 %v60, %v59
    %v62 = vld [vmem:[%s3] sm:$0xff]
    %v63 = vld [vmem:[%s3 + $0x8] sm:$0xff]
    %v64 = vld [vmem:[%s3 + $0x10] sm:$0xff]
    %v65 = vld [vmem:[%s3 + $0x18] sm:$0xff]
    %v66 = vld [vmem:[%s3 + $0x20] sm:$0xff]
    %v67 = vld [vmem:[%s3 + $0x28] sm:$0xff]
    %v68 = vld [vmem:[%s3 + $0x30] sm:$0xff]
    %v69 = vld [vmem:[%s3 + $0x38] sm:$0xff]
    %v70 = vpack.c.bf16 %v63, %v62
    %v71 = vpack.c.bf16 %v65, %v64
    %v72 = vpack.c.bf16 %v67, %v66
    %v73 = vpack.c.bf16 %v69, %v68
    %v74 = vld [vmem:[%s4] sm:$0x1]
    %v76 = vperm.slane %v74, 0
    %vm78 = vcmask 523264
    %v80 = vsel %vm78, %v61, 0
    %82 = vmatpush.bf16.msra.mxu0 0
    %83 = vmatpush.bf16.msra.mxu0 0
    %84 = vmatpush.bf16.msra.mxu0 0
    %85 = vmatpush.bf16.msra.mxu0 0
    %86 = vmatpush.bf16.msra.mxu0 %v73
    %87 = vmatpush.bf16.msra.mxu0 %v72
    %88 = vmatpush.bf16.msra.mxu0 %v71
    %89 = vmatpush.bf16.msra.mxu0 %v70
    %90 = vmatmul.bf16.gmra.mxu0 %v80
    %v91 = vpop.f32.mrf.mxu0
    %v92 = vadd.f32 %v76, %v91
    %v93 = vpop.f32.mrf.mxu0
    %v94 = vadd.f32 %v76, %v93
    %95 = vdwg.mxu0
    %v96 = vadd.f32 %v28, %v92
    %v97 = vadd.f32 %v29, %v94
    %v98 = vld [vmem:[%s5] sm:$0x1]
    %v99 = vld [vmem:[%s6] sm:$0x1]
    %v100 = vsel %vm41, %v96, 0.0
    %101 = vadd.xlane.f32.xlu0 %v100
    %v102 = vpop.xlane.xlu0 %101
    %v103 = vsel %vm41, %v97, 0.0
    %104 = vadd.xlane.f32.xlu0 %v103
    %v105 = vpop.xlane.xlu0 %104
    %v106 = vrcp.pop 32.0
    %v107 = vmul.f32 32.0, %v106
    %v108 = vsub.f32 1.0, %v107
    %v109 = vmul.f32 %v106, %v108
    %v110 = vadd.f32 %v106, %v109
    %vm111 = vweird.f32 %v106
    %v112 = vsel %vm111, %v106, %v110
    %v113 = vmul.f32 %v102, %v112
    %v114 = vmul.f32 %v105, %v112
    %v115 = vsub.f32 %v96, %v113
    %v116 = vsub.f32 %v97, %v114
    %v117 = vmul.f32 %v115, %v115
    %v118 = vmul.f32 %v116, %v116
    %v119 = vsel %vm41, %v117, 0.0
    %120 = vadd.xlane.f32.xlu0 %v119
    %v121 = vpop.xlane.xlu0 %120
    %v122 = vsel %vm41, %v118, 0.0
    %123 = vadd.xlane.f32.xlu0 %v122
    %v124 = vpop.xlane.xlu0 %123
    %v125 = vmul.f32 %v121, %v112
    %v126 = vmul.f32 %v124, %v112
    %v127 = vadd.f32 %v125, 1e-12
    %v128 = vadd.f32 %v126, 1e-12
    %v129 = vrsqrt.pop %v127
    %v130 = vmul.f32 %v129, %v127
    %v131 = vmul.f32 %v130, %v129
    %v132 = vmul.f32 0.5, %v131
    %v133 = vsub.f32 1.5, %v132
    %v134 = vmul.f32 %v129, %v133
    %vm135 = vweird.f32 %v127
    %vm136 = vweird.f32 %v129
    %vm137 = vmor %vm135, %vm136
    %v138 = vsel %vm137, %v129, %v134
    %v139 = vrsqrt.pop %v128
    %v140 = vmul.f32 %v139, %v128
    %v141 = vmul.f32 %v140, %v139
    %v142 = vmul.f32 0.5, %v141
    %v143 = vsub.f32 1.5, %v142
    %v144 = vmul.f32 %v139, %v143
    %vm145 = vweird.f32 %v128
    %vm146 = vweird.f32 %v139
    %vm147 = vmor %vm145, %vm146
    %v148 = vsel %vm147, %v139, %v144
    %v149 = vmul.f32 %v115, %v138
    %v150 = vmul.f32 %v116, %v148
    %v152 = vperm.slane %v98, 0
    %v154 = vmul.f32 %v149, %v152
    %v155 = vmul.f32 %v150, %v152
    %v157 = vperm.slane %v99, 0
    %v159 = vadd.f32 %v154, %v157
    %v160 = vadd.f32 %v155, %v157
    %161 = vst.msk [vmem:[#allocation2] sm:$0xff] %vm41, %v159
    %162 = vst.msk [vmem:[#allocation2 + $0x8] sm:$0xff] %vm41, %v160
    // Predicated region
    $region30: #{decoder_layer.5} parent=1 // pred_check
      _
    $region31: #{decoder_layer.5} parent=1 // pred_check_branch
      %164 = sbr.rel (0) target = $region33
    $region32: #{decoder_layer.5} parent=1 // pred_region
      %166 = vsyncadd [#allocation3], 0
      %s167 = sshll.u32 [#allocation2], 4
      %s168 = int_to_ptr.vmem [resolvable:$true] %s167
      %s169 = sshll.u32 %s7, 4
      %s170 = int_to_ptr.hbm [resolvable:$true] %s169
      %175 = dma.vmem_to_hbm [thread:$0]  %s168, 256, %s170, [#allocation3], 128, 128, 8
    $region33: #{decoder_layer.5} parent=1 // pred_fallthru
      _
    // Predicated region
    $region34: #{decoder_layer.5} parent=1 // pred_check
      _
    $region35: #{decoder_layer.5} parent=1 // pred_check_branch
      %177 = sbr.rel (0) target = $region37
    $region36: #{decoder_layer.5} parent=1 // pred_region
      %179 = dma.done [#allocation3], 256
    $region37: #{decoder_layer.5} parent=1 // pred_fallthru
      _
    %180 = vsyncpa [#allocation3], 1

// kernel: decoder_layer.4
$region0: #{decoder_layer.4}
  #allocation0 [shape = 'u32[]', space=smem, size = 0x4, offset = 0x4, fixed_abs, tag = 'smem constant byte address 0x4 - core index']
  #allocation1 [shape = 'u32[72,128]{1,0:T(1,128)}', space=vmem, size = 0x9000, scoped, tag = 'internal scratch']
  %s0 = inlined_call_operand.vmem [shape: f32[2,8,32], index: 0, kind: input, shape index: {}]
  %s1 = inlined_call_operand.hbm [shape: f32[2,8,32], index: 1, kind: input, shape index: {}]
  %s2 = inlined_call_operand.hbm [shape: f32[2,1,8,8], index: 2, kind: input, shape index: {}]
  %s3 = inlined_call_operand.hbm [shape: f32[32,96], index: 3, kind: input, shape index: {}]
  %s4 = inlined_call_operand.vmem [shape: f32[1,96], index: 4, kind: input, shape index: {}]
  %s5 = inlined_call_operand.hbm [shape: f32[32,32], index: 5, kind: input, shape index: {}]
  %s6 = inlined_call_operand.vmem [shape: f32[1,32], index: 6, kind: input, shape index: {}]
  %s7 = inlined_call_operand.vmem [shape: f32[1,32], index: 7, kind: input, shape index: {}]
  %s8 = inlined_call_operand.vmem [shape: f32[1,32], index: 8, kind: input, shape index: {}]
  %s9 = inlined_call_operand.vmem [shape: f32[2,8,32], index: 9, kind: output, shape index: {}]
  %s10 = sld [smem:[#allocation0]]
  $region85: #{decoder_layer.4} parent=0
    _
  %s12 = ssub.s32 1, %s10
  %s13 = scalar_select 0, %s12, %s10
  $region1: #{decoder_layer.4} parent=0
    #allocation2 [shape = 'u8[8192]{0}', space=vmem, size = 0x2000, scoped, tag = 'input window, operand 1']
    #allocation3 [shape = 's32[2]{0}', space=sflag, size = 0x8, scoped, tag = 'scoped memory for decoder_layer.4']
    #allocation4 [shape = 'u8[8192]{0}', space=vmem, size = 0x2000, scoped, tag = 'input window, operand 2']
    #allocation5 [shape = 's32[2]{0}', space=sflag, size = 0x8, scoped, tag = 'scoped memory for decoder_layer.4']
    #allocation6 [shape = 'u8[16384]{0}', space=vmem, size = 0x4000, scoped, tag = 'input window, operand 3, single buffered']
    #allocation7 [shape = 'u8[16384]{0}', space=vmem, size = 0x4000, scoped, tag = 'input window, operand 5, single buffered']
    #allocation8 [shape = 's32[1]{0}', space=sflag, size = 0x4, scoped, tag = 'scoped memory for decoder_layer.4']
    %14 = vsyncpa [#allocation3], 0
    %s15 = scalar_lea.sflag [#allocation3], 1
    %16 = vsyncpa %s15, 0
    %17 = vsyncpa [#allocation5], 0
    %s18 = scalar_lea.sflag [#allocation5], 1
    %19 = vsyncpa %s18, 0
    %20 = vsyncpa [#allocation8], 0
    loop: start=0, step=1, limit=4
    $region2: #{decoder_layer.4} parent=1 // loop_pre_header
      _
    $region3: #{decoder_layer.4} parent=1 // loop_header
      %s22 = sphi 0, %s26
      %p23 = scmp.ge.s32.totalorder %s22, 4
      %s32 = sphi 0, %s34
      %s35 = sphi 0, %s32
      %s36 = sphi 0, %s35
      %s52 = sphi 0, %s36
      %s58 = sphi 0, %s60
      %s61 = sphi 0, %s58
      %s62 = sphi 0, %s61
      %s78 = sphi 0, %s62
      %s84 = sphi 0, %s86
      %s87 = sphi 0, %s84
      %s88 = sphi 0, %s87
      %s104 = sphi 0, %s88
      %s108 = sphi 0, %s108
      %s110 = sphi 0, %s108
      %s111 = sphi 0, %s110
      %s125 = sphi 0, %s111
      %s129 = sphi 0, %s129
      %s131 = sphi 0, %s129
      %s132 = sphi 0, %s131
      %s146 = sphi 0, %s132
      %s150 = sphi 0, %s150
      %s152 = sphi 0, %s150
      %s153 = sphi 0, %s152
      %s167 = sphi 0, %s153
      %s171 = sphi 0, %s171
      %s173 = sphi 0, %s171
      %s174 = sphi 0, %s173
      %s188 = sphi 0, %s174
      %s192 = sphi 0, %s192
      %s194 = sphi 0, %s192
      %s195 = sphi 0, %s194
      %s209 = sphi 0, %s195
      %s213 = sphi 0, %s213
      %s215 = sphi 0, %s213
      %s216 = sphi 0, %s215
      %s230 = sphi 0, %s216
      %s236 = sphi 0, %s238
      %s239 = sphi 0, %s236
      %s240 = sphi 0, %s239
      %s256 = sphi 0, %s240
    $region4: #{decoder_layer.4} parent=1 // loop_header_branch
      %25 = sbr.rel (%p23) target = $region8
    $region5: #{decoder_layer.4} parent=1 // loop_body
      %s27 = ssub.s32 %s22, 1
      %s28 = ssub.s32 %s22, 2
      %s29 = sadd.s32 %s22, 1
      %s30 = ssub.s32 %s22, %s29
      %p31 = scmp.eq.s32.totalorder %s30, 0
      %s33 = sadd.s32 %s32, 1
      %s34 = scalar_select %p31, %s32, %s33
      %p37 = pneg %p31
      %p38 = scmp.eq.s32.totalorder %s22, 1
      %p39 = por %p37, %p38
      %p40 = scmp.ne.s32.totalorder %s32, %s35
      %p41 = scmp.eq.s32.totalorder %s22, 0
      %p42 = por %p40, %p41
      %p43 = scmp.ne.s32.totalorder %s32, %s35
      %p44 = scmp.eq.s32.totalorder %s27, 1
      %p45 = por %p43, %p44
      %p46 = scmp.ne.s32.totalorder %s35, %s36
      %p47 = scmp.eq.s32.totalorder %s27, 0
      %p48 = por %p46, %p47
      %p49 = scmp.ne.s32.totalorder %s35, %s36
      %p50 = scmp.eq.s32.totalorder %s28, 1
      %p51 = por %p49, %p50
      %p53 = scmp.ne.s32.totalorder %s36, %s52
      %p54 = scmp.eq.s32.totalorder %s28, 0
      %p55 = por %p53, %p54
      %s56 = ssub.s32 %s22, %s29
      %p57 = scmp.eq.s32.totalorder %s56, 0
      %s59 = sadd.s32 %s58, 1
      %s60 = scalar_select %p57, %s58, %s59
      %p63 = pneg %p57
      %p64 = scmp.eq.s32.totalorder %s22, 1
      %p65 = por %p63, %p64
      %p66 = scmp.ne.s32.totalorder %s58, %s61
      %p67 = scmp.eq.s32.totalorder %s22, 0
      %p68 = por %p66, %p67
      %p69 = scmp.ne.s32.totalorder %s58, %s61
      %p70 = scmp.eq.s32.totalorder %s27, 1
      %p71 = por %p69, %p70
      %p72 = scmp.ne.s32.totalorder %s61, %s62
      %p73 = scmp.eq.s32.totalorder %s27, 0
      %p74 = por %p72, %p73
      %p75 = scmp.ne.s32.totalorder %s61, %s62
      %p76 = scmp.eq.s32.totalorder %s28, 1
      %p77 = por %p75, %p76
      %p79 = scmp.ne.s32.totalorder %s62, %s78
      %p80 = scmp.eq.s32.totalorder %s28, 0
      %p81 = por %p79, %p80
      %s82 = ssub.s32 %s22, %s29
      %p83 = scmp.eq.s32.totalorder %s82, 0
      %s85 = sadd.s32 %s84, 1
      %s86 = scalar_select %p83, %s84, %s85
      %p89 = pneg %p83
      %p90 = scmp.eq.s32.totalorder %s22, 1
      %p91 = por %p89, %p90
      %p92 = scmp.ne.s32.totalorder %s84, %s87
      %p93 = scmp.eq.s32.totalorder %s22, 0
      %p94 = por %p92, %p93
      %p95 = scmp.ne.s32.totalorder %s84, %s87
      %p96 = scmp.eq.s32.totalorder %s27, 1
      %p97 = por %p95, %p96
      %p98 = scmp.ne.s32.totalorder %s87, %s88
      %p99 = scmp.eq.s32.totalorder %s27, 0
      %p100 = por %p98, %p99
      %p101 = scmp.ne.s32.totalorder %s87, %s88
      %p102 = scmp.eq.s32.totalorder %s28, 1
      %p103 = por %p101, %p102
      %p105 = scmp.ne.s32.totalorder %s88, %s104
      %p106 = scmp.eq.s32.totalorder %s28, 0
      %p107 = por %p105, %p106
      %s109 = sadd.s32 %s108, 1
      %p112 = scmp.eq.s32.totalorder %s22, 1
      %p113 = scmp.ne.s32.totalorder %s108, %s110
      %p114 = scmp.eq.s32.totalorder %s22, 0
      %p115 = por %p113, %p114
      %p116 = scmp.ne.s32.totalorder %s108, %s110
      %p117 = scmp.eq.s32.totalorder %s27, 1
      %p118 = por %p116, %p117
      %p119 = scmp.ne.s32.totalorder %s110, %s111
      %p120 = scmp.eq.s32.totalorder %s27, 0
      %p121 = por %p119, %p120
      %p122 = scmp.ne.s32.totalorder %s110, %s111
      %p123 = scmp.eq.s32.totalorder %s28, 1
      %p124 = por %p122, %p123
      %p126 = scmp.ne.s32.totalorder %s111, %s125
      %p127 = scmp.eq.s32.totalorder %s28, 0
      %p128 = por %p126, %p127
      %s130 = sadd.s32 %s129, 1
      %p133 = scmp.eq.s32.totalorder %s22, 1
      %p134 = scmp.ne.s32.totalorder %s129, %s131
      %p135 = scmp.eq.s32.totalorder %s22, 0
      %p136 = por %p134, %p135
      %p137 = scmp.ne.s32.totalorder %s129, %s131
      %p138 = scmp.eq.s32.totalorder %s27, 1
      %p139 = por %p137, %p138
      %p140 = scmp.ne.s32.totalorder %s131, %s132
      %p141 = scmp.eq.s32.totalorder %s27, 0
      %p142 = por %p140, %p141
      %p143 = scmp.ne.s32.totalorder %s131, %s132
      %p144 = scmp.eq.s32.totalorder %s28, 1
      %p145 = por %p143, %p144
      %p147 = scmp.ne.s32.totalorder %s132, %s146
      %p148 = scmp.eq.s32.totalorder %s28, 0
      %p149 = por %p147, %p148
      %s151 = sadd.s32 %s150, 1
      %p154 = scmp.eq.s32.totalorder %s22, 1
      %p155 = scmp.ne.s32.totalorder %s150, %s152
      %p156 = scmp.eq.s32.totalorder %s22, 0
      %p157 = por %p155, %p156
      %p158 = scmp.ne.s32.totalorder %s150, %s152
      %p159 = scmp.eq.s32.totalorder %s27, 1
      %p160 = por %p158, %p159
      %p161 = scmp.ne.s32.totalorder %s152, %s153
      %p162 = scmp.eq.s32.totalorder %s27, 0
      %p163 = por %p161, %p162
      %p164 = scmp.ne.s32.totalorder %s152, %s153
      %p165 = scmp.eq.s32.totalorder %s28, 1
      %p166 = por %p164, %p165
      %p168 = scmp.ne.s32.totalorder %s153, %s167
      %p169 = scmp.eq.s32.totalorder %s28, 0
      %p170 = por %p168, %p169
      %s172 = sadd.s32 %s171, 1
      %p175 = scmp.eq.s32.totalorder %s22, 1
      %p176 = scmp.ne.s32.totalorder %s171, %s173
      %p177 = scmp.eq.s32.totalorder %s22, 0
      %p178 = por %p176, %p177
      %p179 = scmp.ne.s32.totalorder %s171, %s173
      %p180 = scmp.eq.s32.totalorder %s27, 1
      %p181 = por %p179, %p180
      %p182 = scmp.ne.s32.totalorder %s173, %s174
      %p183 = scmp.eq.s32.totalorder %s27, 0
      %p184 = por %p182, %p183
      %p185 = scmp.ne.s32.totalorder %s173, %s174
      %p186 = scmp.eq.s32.totalorder %s28, 1
      %p187 = por %p185, %p186
      %p189 = scmp.ne.s32.totalorder %s174, %s188
      %p190 = scmp.eq.s32.totalorder %s28, 0
      %p191 = por %p189, %p190
      %s193 = sadd.s32 %s192, 1
      %p196 = scmp.eq.s32.totalorder %s22, 1
      %p197 = scmp.ne.s32.totalorder %s192, %s194
      %p198 = scmp.eq.s32.totalorder %s22, 0
      %p199 = por %p197, %p198
      %p200 = scmp.ne.s32.totalorder %s192, %s194
      %p201 = scmp.eq.s32.totalorder %s27, 1
      %p202 = por %p200, %p201
      %p203 = scmp.ne.s32.totalorder %s194, %s195
      %p204 = scmp.eq.s32.totalorder %s27, 0
      %p205 = por %p203, %p204
      %p206 = scmp.ne.s32.totalorder %s194, %s195
      %p207 = scmp.eq.s32.totalorder %s28, 1
      %p208 = por %p206, %p207
      %p210 = scmp.ne.s32.totalorder %s195, %s209
      %p211 = scmp.eq.s32.totalorder %s28, 0
      %p212 = por %p210, %p211
      %s214 = sadd.s32 %s213, 1
      %p217 = scmp.eq.s32.totalorder %s22, 1
      %p218 = scmp.ne.s32.totalorder %s213, %s215
      %p219 = scmp.eq.s32.totalorder %s22, 0
      %p220 = por %p218, %p219
      %p221 = scmp.ne.s32.totalorder %s213, %s215
      %p222 = scmp.eq.s32.totalorder %s27, 1
      %p223 = por %p221, %p222
      %p224 = scmp.ne.s32.totalorder %s215, %s216
      %p225 = scmp.eq.s32.totalorder %s27, 0
      %p226 = por %p224, %p225
      %p227 = scmp.ne.s32.totalorder %s215, %s216
      %p228 = scmp.eq.s32.totalorder %s28, 1
      %p229 = por %p227, %p228
      %p231 = scmp.ne.s32.totalorder %s216, %s230
      %p232 = scmp.eq.s32.totalorder %s28, 0
      %p233 = por %p231, %p232
      %s234 = ssub.s32 %s22, %s29
      %p235 = scmp.eq.s32.totalorder %s234, 0
      %s237 = sadd.s32 %s236, 1
      %s238 = scalar_select %p235, %s236, %s237
      %p241 = pneg %p235
      %p242 = scmp.eq.s32.totalorder %s22, 1
      %p243 = por %p241, %p242
      %p244 = scmp.ne.s32.totalorder %s236, %s239
      %p245 = scmp.eq.s32.totalorder %s22, 0
      %p246 = por %p244, %p245
      %p247 = scmp.ne.s32.totalorder %s236, %s239
      %p248 = scmp.eq.s32.totalorder %s27, 1
      %p249 = por %p247, %p248
      %p250 = scmp.ne.s32.totalorder %s239, %s240
      %p251 = scmp.eq.s32.totalorder %s27, 0
      %p252 = por %p250, %p251
      %p253 = scmp.ne.s32.totalorder %s239, %s240
      %p254 = scmp.eq.s32.totalorder %s28, 1
      %p255 = por %p253, %p254
      %p257 = scmp.ne.s32.totalorder %s240, %s256
      %p258 = scmp.eq.s32.totalorder %s28, 0
      %p259 = por %p257, %p258
      %p260 = scmp.le.s32.totalorder 1, %s22
      %p261 = scmp.lt.s32.totalorder %s22, 3
      %p262 = pnand %p260, %p261
      %p263 = pneg %p262
      // Predicated region
      $region9: #{decoder_layer.4} parent=5 // pred_check
        _
      $region10: #{decoder_layer.4} parent=5 // pred_check_branch
        %265 = sbr.rel (%p262) target = $region12
      $region11: #{decoder_layer.4} parent=5 // pred_region
        %s266 = ssub.s32 %s22, 1
        // Predicated region
        $region13: #{decoder_layer.4} parent=11 // pred_check
          %p267 = pneg %p121
        $region14: #{decoder_layer.4} parent=11 // pred_check_branch
          %269 = sbr.rel (%p267) target = $region16
        $region15: #{decoder_layer.4} parent=11 // pred_region
          %271 = vsyncadd [#allocation5], 0
          %s272 = sshll.u32 %s3, 4
          %s273 = int_to_ptr.hbm [resolvable:$true] %s272
          %s274 = sshll.u32 [#allocation6], 4
          %s275 = int_to_ptr.vmem [resolvable:$true] %s274
          %280 = dma.hbm_to_vmem [thread:$0]  %s273, 512, %s275, [#allocation5], 128, 128, 8
        $region16: #{decoder_layer.4} parent=11 // pred_fallthru
          _
        // Predicated region
        $region17: #{decoder_layer.4} parent=11 // pred_check
          %p281 = pneg %p142
        $region18: #{decoder_layer.4} parent=11 // pred_check_branch
          %283 = sbr.rel (%p281) target = $region20
        $region19: #{decoder_layer.4} parent=11 // pred_region
          _
        $region20: #{decoder_layer.4} parent=11 // pred_fallthru
          _
        // Predicated region
        $region21: #{decoder_layer.4} parent=11 // pred_check
          %p284 = pneg %p163
        $region22: #{decoder_layer.4} parent=11 // pred_check_branch
          %286 = sbr.rel (%p284) target = $region24
        $region23: #{decoder_layer.4} parent=11 // pred_region
          %288 = vsyncadd [#allocation8], 0
          %s289 = sshll.u32 %s5, 4
          %s290 = int_to_ptr.hbm [resolvable:$true] %s289
          %s291 = sshll.u32 [#allocation7], 4
          %s292 = int_to_ptr.vmem [resolvable:$true] %s291
          %297 = dma.hbm_to_vmem [thread:$0]  %s290, 512, %s292, [#allocation8], 128, 128, 8
        $region24: #{decoder_layer.4} parent=11 // pred_fallthru
          _
        // Predicated region
        $region25: #{decoder_layer.4} parent=11 // pred_check
          %p298 = pneg %p184
        $region26: #{decoder_layer.4} parent=11 // pred_check_branch
          %300 = sbr.rel (%p298) target = $region28
        $region27: #{decoder_layer.4} parent=11 // pred_region
          _
        $region28: #{decoder_layer.4} parent=11 // pred_fallthru
          _
        // Predicated region
        $region29: #{decoder_layer.4} parent=11 // pred_check
          %p301 = pneg %p205
        $region30: #{decoder_layer.4} parent=11 // pred_check_branch
          %303 = sbr.rel (%p301) target = $region32
        $region31: #{decoder_layer.4} parent=11 // pred_region
          _
        $region32: #{decoder_layer.4} parent=11 // pred_fallthru
          _
        // Predicated region
        $region33: #{decoder_layer.4} parent=11 // pred_check
          %p304 = pneg %p226
        $region34: #{decoder_layer.4} parent=11 // pred_check_branch
          %306 = sbr.rel (%p304) target = $region36
        $region35: #{decoder_layer.4} parent=11 // pred_region
          _
        $region36: #{decoder_layer.4} parent=11 // pred_fallthru
          _
      $region12: #{decoder_layer.4} parent=5 // pred_fallthru
        _
      %p307 = scmp.lt.s32.totalorder %s22, 2
      // Predicated region
      $region37: #{decoder_layer.4} parent=5 // pred_check
        %p308 = pneg %p307
      $region38: #{decoder_layer.4} parent=5 // pred_check_branch
        %310 = sbr.rel (%p308) target = $region40
      $region39: #{decoder_layer.4} parent=5 // pred_region
        // Predicated region
        $region41: #{decoder_layer.4} parent=39 // pred_check
          %p311 = pneg %p42
        $region42: #{decoder_layer.4} parent=39 // pred_check_branch
          %313 = sbr.rel (%p311) target = $region44
        $region43: #{decoder_layer.4} parent=39 // pred_region
          %p314 = scmp.lt.s32.totalorder %s22, 1
          %s315 = scalar_select %p314, %s22, 1
          %s316 = smul.addr %s315, 8
          %s317 = scalar_lea.vmem %s0, %s316
        $region44: #{decoder_layer.4} parent=39 // pred_fallthru
          _
        // Predicated region
        $region45: #{decoder_layer.4} parent=39 // pred_check
          %p318 = pneg %p68
        $region46: #{decoder_layer.4} parent=39 // pred_check_branch
          %320 = sbr.rel (%p318) target = $region48
        $region47: #{decoder_layer.4} parent=39 // pred_region
          %s321 = sand.u32 %s58, 1
          %s322 = scalar_lea.sflag [#allocation3], %s321
          %s323 = sand.u32 %s58, 1
          %s324 = smul.addr %s323, 8
          %s325 = scalar_lea.vmem [#allocation2], %s324
          %327 = vsyncadd %s322, 0
          %s328 = smul.addr %s22, 8
          %s329 = scalar_lea.hbm %s1, %s328
          %s331 = sshll.u32 %s329, 4
          %s332 = int_to_ptr.hbm [resolvable:$true] %s331
          %s333 = sshll.u32 %s325, 4
          %s334 = int_to_ptr.vmem [resolvable:$true] %s333
          %336 = dma.hbm_to_vmem [thread:$0]  %s332, 128, %s334, %s322
        $region48: #{decoder_layer.4} parent=39 // pred_fallthru
          _
        // Predicated region
        $region49: #{decoder_layer.4} parent=39 // pred_check
          %p337 = pneg %p94
        $region50: #{decoder_layer.4} parent=39 // pred_check_branch
          %339 = sbr.rel (%p337) target = $region52
        $region51: #{decoder_layer.4} parent=39 // pred_region
          %s340 = sand.u32 %s22, 1
          %s341 = scalar_lea.sflag [#allocation5], %s340
          %s342 = sand.u32 %s84, 1
          %s343 = smul.addr %s342, 8
          %s344 = scalar_lea.vmem [#allocation4], %s343
          %346 = vsyncadd %s341, 0
          %s347 = smul.addr %s22, 8
          %s348 = scalar_lea.hbm %s2, %s347
          %s350 = sshll.u32 %s348, 4
          %s351 = int_to_ptr.hbm [resolvable:$true] %s350
          %s352 = sshll.u32 %s344, 4
          %s353 = int_to_ptr.vmem [resolvable:$true] %s352
          %355 = dma.hbm_to_vmem [thread:$0]  %s351, 128, %s353, %s341
        $region52: #{decoder_layer.4} parent=39 // pred_fallthru
          _
      $region40: #{decoder_layer.4} parent=5 // pred_fallthru
        _
      %p356 = scmp.le.s32.totalorder 1, %s22
      %p357 = scmp.lt.s32.totalorder %s22, 3
      %p358 = pnand %p356, %p357
      %p359 = pneg %p358
      // Predicated region
      $region53: #{decoder_layer.4} parent=5 // pred_check
        _
      $region54: #{decoder_layer.4} parent=5 // pred_check_branch
        %361 = sbr.rel (%p358) target = $region56
      $region55: #{decoder_layer.4} parent=5 // pred_region
        %s362 = ssub.s32 %s22, 1
        %s363 = sand.u32 %s61, 1
        %s364 = scalar_lea.sflag [#allocation3], %s363
        %s365 = sand.u32 %s61, 1
        %s366 = smul.addr %s365, 8
        %s367 = scalar_lea.vmem [#allocation2], %s366
        // Predicated region
        $region57: #{decoder_layer.4} parent=55 // pred_check
          %p368 = pneg %p74
        $region58: #{decoder_layer.4} parent=55 // pred_check_branch
          %370 = sbr.rel (%p368) target = $region60
        $region59: #{decoder_layer.4} parent=55 // pred_region
          %372 = dma.done %s364, 128
        $region60: #{decoder_layer.4} parent=55 // pred_fallthru
          _
        %s373 = sand.u32 %s27, 1
        %s374 = scalar_lea.sflag [#allocation5], %s373
        %s375 = sand.u32 %s87, 1
        %s376 = smul.addr %s375, 8
        %s377 = scalar_lea.vmem [#allocation4], %s376
        // Predicated region
        $region61: #{decoder_layer.4} parent=55 // pred_check
          %p378 = pneg %p100
        $region62: #{decoder_layer.4} parent=55 // pred_check_branch
          %380 = sbr.rel (%p378) target = $region64
        $region63: #{decoder_layer.4} parent=55 // pred_region
          %382 = dma.done %s374, 128
        $region64: #{decoder_layer.4} parent=55 // pred_fallthru
          _
        // Predicated region
        $region65: #{decoder_layer.4} parent=55 // pred_check
          %p383 = pneg %p121
        $region66: #{decoder_layer.4} parent=55 // pred_check_branch
          %385 = sbr.rel (%p383) target = $region68
        $region67: #{decoder_layer.4} parent=55 // pred_region
          %387 = dma.done [#allocation5], 512
        $region68: #{decoder_layer.4} parent=55 // pred_fallthru
          _
        // Predicated region
        $region69: #{decoder_layer.4} parent=55 // pred_check
          %p388 = pneg %p163
        $region70: #{decoder_layer.4} parent=55 // pred_check_branch
          %390 = sbr.rel (%p388) target = $region72
        $region71: #{decoder_layer.4} parent=55 // pred_region
          %392 = dma.done [#allocation8], 512
        $region72: #{decoder_layer.4} parent=55 // pred_fallthru
          _
        %p393 = scmp.lt.s32.totalorder %s27, 1
        %s394 = scalar_select %p393, %s27, 1
        %s395 = smul.addr %s394, 8
        %s396 = scalar_lea.vmem %s0, %s395
        %p397 = pneg %p48
        %p398 = pneg %p45
        %s399 = sand.u32 %s61, 1
        %s400 = scalar_lea.sflag [#allocation3], %s399
        %s401 = sand.u32 %s61, 1
        %s402 = smul.addr %s401, 8
        %s403 = scalar_lea.vmem [#allocation2], %s402
        %p404 = pneg %p74
        %p405 = pneg %p71
        %s406 = sand.u32 %s27, 1
        %s407 = scalar_lea.sflag [#allocation5], %s406
        %s408 = sand.u32 %s87, 1
        %s409 = smul.addr %s408, 8
        %s410 = scalar_lea.vmem [#allocation4], %s409
        %p411 = pneg %p100
        %p412 = pneg %p97
        %p413 = pneg %p121
        %p414 = pneg %p118
        %p415 = pneg %p142
        %p416 = pneg %p139
        %p417 = pneg %p163
        %p418 = pneg %p160
        %p419 = pneg %p184
        %p420 = pneg %p181
        %p421 = pneg %p205
        %p422 = pneg %p202
        %p423 = pneg %p226
        %p424 = pneg %p223
        %p425 = pneg %p252
        %p426 = pneg %p249
        %p427 = scmp.lt.s32.totalorder %s27, 1
        %s428 = scalar_select %p427, %s27, 1
        %s429 = smul.addr %s428, 8
        %s430 = scalar_lea.vmem %s9, %s429
        %p431 = scmp.lt.s32.totalorder %s27, 1
        %s432 = scalar_select %p431, %s27, 1
        %s433 = smul.addr %s432, 8
        %s434 = scalar_lea.vmem %s0, %s433
        %p435 = scmp.lt.s32.totalorder %s27, 1
        %s436 = scalar_select %p435, %s27, 1
        %s437 = smul.addr %s436, 8
        %s438 = scalar_lea.vmem %s9, %s437
        %v440 = vld [vmem:[%s434] sm:$0xff]
        %v441 = vld [vmem:[%s377] sm:$0xff]
        %v442 = vld [vmem:[#allocation6] sm:$0xff]
        %v443 = vld [vmem:[#allocation6 + $0x8] sm:$0xff]
        %v444 = vld [vmem:[#allocation6 + $0x10] sm:$0xff]
        %v445 = vld [vmem:[#allocation6 + $0x18] sm:$0xff]
        %v446 = vld [vmem:[%s4] sm:$0x1]
        %v447 = vpack.c.bf16 %v440, %v440
        %v448 = vld [vmem:[%s367] sm:$0xff]
        %v449 = vpack.c.bf16 %v448, %v448
        %v450 = vpack.c.bf16 %v443, %v442
        %v451 = vpack.c.bf16 %v445, %v444
        %v453 = vperm.slane %v446, 0
        %vm455 = vcmask 261120
        %v457 = vsel %vm455, %v447, 0
        %459 = vmatpush.bf16.msra.mxu0 0
        %460 = vmatpush.bf16.msra.mxu0 0
        %461 = vmatpush.bf16.msra.mxu0 0
        %462 = vmatpush.bf16.msra.mxu0 0
        %463 = vmatpush.bf16.msra.mxu0 0
        %464 = vmatpush.bf16.msra.mxu0 0
        %465 = vmatpush.bf16.msra.mxu0 %v451
        %466 = vmatpush.bf16.msra.mxu0 %v450
        %467 = vmatmul.bf16.gmra.mxu0 %v457
        %v468 = vpop.f32.mrf.mxu0
        %v469 = vadd.f32 %v453, %v468
        %v470 = vpop.f32.mrf.mxu0
        %471 = vdwg.mxu0
        %474 = vrot.lane.b32.xlu0 %v450, 96
        %v475 = vpop.permute.xlu0 %474
        %476 = vrot.lane.b32.xlu0 %v451, 96
        %v477 = vpop.permute.xlu0 %476
        %480 = vrot.lane.b32.xlu0 %v453, 96
        %v481 = vpop.permute.xlu0 %480
        %v484 = vsel %vm455, %v449, 0
        %486 = vmatpush.bf16.msra.mxu0 0
        %487 = vmatpush.bf16.msra.mxu0 0
        %488 = vmatpush.bf16.msra.mxu0 0
        %489 = vmatpush.bf16.msra.mxu0 0
        %490 = vmatpush.bf16.msra.mxu0 0
        %491 = vmatpush.bf16.msra.mxu0 0
        %492 = vmatpush.bf16.msra.mxu0 %v477
        %493 = vmatpush.bf16.msra.mxu0 %v475
        %494 = vmatmul.bf16.gmra.mxu0 %v484
        %v495 = vpop.f32.mrf.mxu0
        %v496 = vadd.f32 %v481, %v495
        %v497 = vpop.f32.mrf.mxu0
        %498 = vdwg.mxu0
        %v499 = vpack.c.bf16 %v469, %v469
        %v500 = vpack.c.bf16 %v496, %v496
        %vm501 = vcmask 64512
        %v503 = vsel %vm501, %v499, 0
        %v506 = vsel %vm501, %v500, 0
        %508 = vmatpush.bf16.xpose.msra.mxu0 0
        %509 = vmatpush.bf16.xpose.msra.mxu0 0
        %510 = vmatpush.bf16.xpose.msra.mxu0 0
        %511 = vmatpush.bf16.xpose.msra.mxu0 0
        %512 = vmatpush.bf16.xpose.msra.mxu0 0
        %513 = vmatpush.bf16.xpose.msra.mxu0 0
        %514 = vmatpush.bf16.xpose.msra.mxu0 0
        %515 = vmatpush.bf16.xpose.msra.mxu0 %v506
        %516 = vmatmul.bf16.gmra.mxu0 %v503
        %v517 = vpop.f32.mrf.mxu0
        %v518 = vadd.f32 0.0, %v517
        %v519 = vpop.f32.mrf.mxu0
        %520 = vdwg.mxu0
        %v521 = vmul.f32 %v518, 0.35355338
        %vm522 = vcmp.eq.f32.partialorder %v441, 0.0
        %v523 = vsel %vm522, -1e+09, %v521
        %v524 = vsel %vm501, %v523, -inf
        %525 = vmax.xlane.f32.xlu0 %v524
        %v526 = vpop.xlane.xlu0 %525
        %v527 = vsub.f32 %v523, %v526
        %v528 = vmul.f32 %v527, 1.442695
        %v529 = vpow.pop %v528
        %v530 = vsel %vm501, %v529, 0.0
        %531 = vadd.xlane.f32.xlu0 %v530
        %v532 = vpop.xlane.xlu0 %531
        %v533 = vrcp.pop %v532
        %v534 = vmul.f32 %v529, %v533
        %v535 = vpack.c.bf16 %v534, %v534
        %537 = vrot.lane.b32.xlu0 %v500, 96
        %v538 = vpop.permute.xlu0 %537
        %v540 = vsel %vm501, %v535, 0
        %vm542 = vcmask 1043456
        %v544 = vsel %vm542, %v538, 0
        %546 = vmatpush.bf16.msra.mxu0 0
        %547 = vmatpush.bf16.msra.mxu0 0
        %548 = vmatpush.bf16.msra.mxu0 0
        %549 = vmatpush.bf16.msra.mxu0 0
        %550 = vmatpush.bf16.msra.mxu0 0
        %551 = vmatpush.bf16.msra.mxu0 0
        %552 = vmatpush.bf16.msra.mxu0 0
        %553 = vmatpush.bf16.msra.mxu0 %v544
        %554 = vmatmul.bf16.gmra.mxu0 %v540
        %v555 = vpop.f32.mrf.mxu0
        %v556 = vadd.f32 0.0, %v555
        %v557 = vpop.f32.mrf.mxu0
        %558 = vdwg.mxu0
        %560 = vrot.lane.b32.xlu0 %v499, 120
        %v561 = vpop.permute.xlu0 %560
        %562 = vrot.lane.b32.xlu0 %v500, 120
        %v563 = vpop.permute.xlu0 %562
        %v565 = vsel %vm501, %v561, 0
        %v568 = vsel %vm501, %v563, 0
        %570 = vmatpush.bf16.xpose.msra.mxu0 0
        %571 = vmatpush.bf16.xpose.msra.mxu0 0
        %572 = vmatpush.bf16.xpose.msra.mxu0 0
        %573 = vmatpush.bf16.xpose.msra.mxu0 0
        %574 = vmatpush.bf16.xpose.msra.mxu0 0
        %575 = vmatpush.bf16.xpose.msra.mxu0 0
        %576 = vmatpush.bf16.xpose.msra.mxu0 0
        %577 = vmatpush.bf16.xpose.msra.mxu0 %v568
        %578 = vmatmul.bf16.gmra.mxu0 %v565
        %v579 = vpop.f32.mrf.mxu0
        %v580 = vadd.f32 0.0, %v579
        %v581 = vpop.f32.mrf.mxu0
        %582 = vdwg.mxu0
        %v583 = vmul.f32 %v580, 0.35355338
        %v584 = vsel %vm522, -1e+09, %v583
        %v585 = vsel %vm501, %v584, -inf
        %586 = vmax.xlane.f32.xlu0 %v585
        %v587 = vpop.xlane.xlu0 %586
        %v588 = vsub.f32 %v584, %v587
        %v589 = vmul.f32 %v588, 1.442695
        %v590 = vpow.pop %v589
        %v591 = vsel %vm501, %v590, 0.0
        %592 = vadd.xlane.f32.xlu0 %v591
        %v593 = vpop.xlane.xlu0 %592
        %v594 = vrcp.pop %v593
        %v595 = vmul.f32 %v590, %v594
        %v596 = vpack.c.bf16 %v595, %v595
        %597 = vrot.lane.b32.xlu0 %v500, 88
        %v598 = vpop.permute.xlu0 %597
        %v600 = vsel %vm501, %v596, 0
        %v603 = vsel %vm542, %v598, 0
        %605 = vmatpush.bf16.msra.mxu0 0
        %606 = vmatpush.bf16.msra.mxu0 0
        %607 = vmatpush.bf16.msra.mxu0 0
        %608 = vmatpush.bf16.msra.mxu0 0
        %609 = vmatpush.bf16.msra.mxu0 0
        %610 = vmatpush.bf16.msra.mxu0 0
        %611 = vmatpush.bf16.msra.mxu0 0
        %612 = vmatpush.bf16.msra.mxu0 %v603
        %613 = vmatmul.bf16.gmra.mxu0 %v600
        %v614 = vpop.f32.mrf.mxu0
        %v615 = vadd.f32 0.0, %v614
        %v616 = vpop.f32.mrf.mxu0
        %617 = vdwg.mxu0
        %618 = vrot.lane.b32.xlu0 %v499, 112
        %v619 = vpop.permute.xlu0 %618
        %620 = vrot.lane.b32.xlu0 %v500, 112
        %v621 = vpop.permute.xlu0 %620
        %v623 = vsel %vm501, %v619, 0
        %v626 = vsel %vm501, %v621, 0
        %628 = vmatpush.bf16.xpose.msra.mxu0 0
        %629 = vmatpush.bf16.xpose.msra.mxu0 0
        %630 = vmatpush.bf16.xpose.msra.mxu0 0
        %631 = vmatpush.bf16.xpose.msra.mxu0 0
        %632 = vmatpush.bf16.xpose.msra.mxu0 0
        %633 = vmatpush.bf16.xpose.msra.mxu0 0
        %634 = vmatpush.bf16.xpose.msra.mxu0 0
        %635 = vmatpush.bf16.xpose.msra.mxu0 %v626
        %636 = vmatmul.bf16.gmra.mxu0 %v623
        %v637 = vpop.f32.mrf.mxu0
        %v638 = vadd.f32 0.0, %v637
        %v639 = vpop.f32.mrf.mxu0
        %640 = vdwg.mxu0
        %v641 = vmul.f32 %v638, 0.35355338
        %v642 = vsel %vm522, -1e+09, %v641
        %v643 = vsel %vm501, %v642, -inf
        %644 = vmax.xlane.f32.xlu0 %v643
        %v645 = vpop.xlane.xlu0 %644
        %v646 = vsub.f32 %v642, %v645
        %v647 = vmul.f32 %v646, 1.442695
        %v648 = vpow.pop %v647
        %v649 = vsel %vm501, %v648, 0.0
        %650 = vadd.xlane.f32.xlu0 %v649
        %v651 = vpop.xlane.xlu0 %650
        %v652 = vrcp.pop %v651
        %v653 = vmul.f32 %v648, %v652
        %v654 = vpack.c.bf16 %v653, %v653
        %655 = vrot.lane.b32.xlu0 %v500, 80
        %v656 = vpop.permute.xlu0 %655
        %v658 = vsel %vm501, %v654, 0
        %v661 = vsel %vm542, %v656, 0
        %663 = vmatpush.bf16.msra.mxu0 0
        %664 = vmatpush.bf16.msra.mxu0 0
        %665 = vmatpush.bf16.msra.mxu0 0
        %666 = vmatpush.bf16.msra.mxu0 0
        %667 = vmatpush.bf16.msra.mxu0 0
        %668 = vmatpush.bf16.msra.mxu0 0
        %669 = vmatpush.bf16.msra.mxu0 0
        %670 = vmatpush.bf16.msra.mxu0 %v661
        %671 = vmatmul.bf16.gmra.mxu0 %v658
        %v672 = vpop.f32.mrf.mxu0
        %v673 = vadd.f32 0.0, %v672
        %v674 = vpop.f32.mrf.mxu0
        %675 = vdwg.mxu0
        %676 = vrot.lane.b32.xlu0 %v499, 104
        %v677 = vpop.permute.xlu0 %676
        %678 = vrot.lane.b32.xlu0 %v500, 104
        %v679 = vpop.permute.xlu0 %678
        %v681 = vsel %vm501, %v677, 0
        %v684 = vsel %vm501, %v679, 0
        %686 = vmatpush.bf16.xpose.msra.mxu0 0
        %687 = vmatpush.bf16.xpose.msra.mxu0 0
        %688 = vmatpush.bf16.xpose.msra.mxu0 0
        %689 = vmatpush.bf16.xpose.msra.mxu0 0
        %690 = vmatpush.bf16.xpose.msra.mxu0 0
        %691 = vmatpush.bf16.xpose.msra.mxu0 0
        %692 = vmatpush.bf16.xpose.msra.mxu0 0
        %693 = vmatpush.bf16.xpose.msra.mxu0 %v684
        %694 = vmatmul.bf16.gmra.mxu0 %v681
        %v695 = vpop.f32.mrf.mxu0
        %v696 = vadd.f32 0.0, %v695
        %v697 = vpop.f32.mrf.mxu0
        %698 = vdwg.mxu0
        %v699 = vmul.f32 %v696, 0.35355338
        %v700 = vsel %vm522, -1e+09, %v699
        %v701 = vsel %vm501, %v700, -inf
        %702 = vmax.xlane.f32.xlu0 %v701
        %v703 = vpop.xlane.xlu0 %702
        %v704 = vsub.f32 %v700, %v703
        %v705 = vmul.f32 %v704, 1.442695
        %v706 = vpow.pop %v705
        %v707 = vsel %vm501, %v706, 0.0
        %708 = vadd.xlane.f32.xlu0 %v707
        %v709 = vpop.xlane.xlu0 %708
        %v710 = vrcp.pop %v709
        %v711 = vmul.f32 %v706, %v710
        %v712 = vpack.c.bf16 %v711, %v711
        %713 = vrot.lane.b32.xlu0 %v500, 72
        %v714 = vpop.permute.xlu0 %713
        %v716 = vsel %vm501, %v712, 0
        %v719 = vsel %vm542, %v714, 0
        %721 = vmatpush.bf16.msra.mxu0 0
        %722 = vmatpush.bf16.msra.mxu0 0
        %723 = vmatpush.bf16.msra.mxu0 0
        %724 = vmatpush.bf16.msra.mxu0 0
        %725 = vmatpush.bf16.msra.mxu0 0
        %726 = vmatpush.bf16.msra.mxu0 0
        %727 = vmatpush.bf16.msra.mxu0 0
        %728 = vmatpush.bf16.msra.mxu0 %v719
        %729 = vmatmul.bf16.gmra.mxu0 %v716
        %v730 = vpop.f32.mrf.mxu0
        %v731 = vadd.f32 0.0, %v730
        %v732 = vpop.f32.mrf.mxu0
        %733 = vdwg.mxu0
        %735 = vrot.lane.b32.xlu0 %v615, 8
        %v736 = vpop.permute.xlu0 %735
        %739 = vrot.lane.b32.xlu0 %v673, 16
        %v740 = vpop.permute.xlu0 %739
        %743 = vrot.lane.b32.xlu0 %v731, 24
        %v744 = vpop.permute.xlu0 %743
        %v746 = vsel %vm501, %v556, %v736
        %vm747 = vcmask 130048
        %v748 = vsel %vm747, %v746, %v740
        %vm749 = vcmask 195584
        %v750 = vsel %vm749, %v748, %v744
        %v751 = vpack.c.bf16 %v750, %v750
        %v752 = vld [vmem:[#allocation7] sm:$0xff]
        %v753 = vld [vmem:[#allocation7 + $0x8] sm:$0xff]
        %v754 = vld [vmem:[#allocation7 + $0x10] sm:$0xff]
        %v755 = vld [vmem:[#allocation7 + $0x18] sm:$0xff]
        %v756 = vpack.c.bf16 %v753, %v752
        %v757 = vpack.c.bf16 %v755, %v754
        %v758 = vld [vmem:[%s6] sm:$0x1]
        %v760 = vperm.slane %v758, 0
        %v763 = vsel %vm455, %v751, 0
        %765 = vmatpush.bf16.msra.mxu0 0
        %766 = vmatpush.bf16.msra.mxu0 0
        %767 = vmatpush.bf16.msra.mxu0 0
        %768 = vmatpush.bf16.msra.mxu0 0
        %769 = vmatpush.bf16.msra.mxu0 0
        %770 = vmatpush.bf16.msra.mxu0 0
        %771 = vmatpush.bf16.msra.mxu0 %v757
        %772 = vmatpush.bf16.msra.mxu0 %v756
        %773 = vmatmul.bf16.gmra.mxu0 %v763
        %v774 = vpop.f32.mrf.mxu0
        %v775 = vadd.f32 %v760, %v774
        %v776 = vpop.f32.mrf.mxu0
        %777 = vdwg.mxu0
        %v778 = vadd.f32 %v440, %v775
        %v779 = vld [vmem:[%s7] sm:$0x1]
        %v780 = vld [vmem:[%s8] sm:$0x1]
        %v781 = vsel %vm455, %v778, 0.0
        %782 = vadd.xlane.f32.xlu0 %v781
        %v783 = vpop.xlane.xlu0 %782
        %v784 = vrcp.pop 32.0
        %v785 = vmul.f32 32.0, %v784
        %v786 = vsub.f32 1.0, %v785
        %v787 = vmul.f32 %v784, %v786
        %v788 = vadd.f32 %v784, %v787
        %vm789 = vweird.f32 %v784
        %v790 = vsel %vm789, %v784, %v788
        %v791 = vmul.f32 %v783, %v790
        %v792 = vsub.f32 %v778, %v791
        %v793 = vmul.f32 %v792, %v792
        %v794 = vsel %vm455, %v793, 0.0
        %795 = vadd.xlane.f32.xlu0 %v794
        %v796 = vpop.xlane.xlu0 %795
        %v797 = vmul.f32 %v796, %v790
        %v798 = vadd.f32 %v797, 1e-12
        %v799 = vrsqrt.pop %v798
        %v800 = vmul.f32 %v799, %v798
        %v801 = vmul.f32 %v800, %v799
        %v802 = vmul.f32 0.5, %v801
        %v803 = vsub.f32 1.5, %v802
        %v804 = vmul.f32 %v799, %v803
        %vm805 = vweird.f32 %v798
        %vm806 = vweird.f32 %v799
        %vm807 = vmor %vm805, %vm806
        %v808 = vsel %vm807, %v799, %v804
        %v809 = vmul.f32 %v792, %v808
        %v811 = vperm.slane %v779, 0
        %v813 = vmul.f32 %v809, %v811
        %v815 = vperm.slane %v780, 0
        %v817 = vadd.f32 %v813, %v815
        %818 = vst.msk [vmem:[%s438] sm:$0xff] %vm455, %v817
        %p819 = scmp.lt.s32.totalorder %s27, 1
        %s820 = scalar_select %p819, %s27, 1
        %s821 = smul.addr %s820, 8
        %s822 = scalar_lea.vmem %s9, %s821
        // Predicated region
        $region73: #{decoder_layer.4} parent=55 // pred_check
          %p823 = pneg %p249
        $region74: #{decoder_layer.4} parent=55 // pred_check_branch
          %825 = sbr.rel (%p823) target = $region76
        $region75: #{decoder_layer.4} parent=55 // pred_region
          _
        $region76: #{decoder_layer.4} parent=55 // pred_fallthru
          _
      $region56: #{decoder_layer.4} parent=5 // pred_fallthru
        _
      %p826 = scmp.le.s32.totalorder 2, %s22
      // Predicated region
      $region77: #{decoder_layer.4} parent=5 // pred_check
        %p827 = pneg %p826
      $region78: #{decoder_layer.4} parent=5 // pred_check_branch
        %829 = sbr.rel (%p827) target = $region80
      $region79: #{decoder_layer.4} parent=5 // pred_region
        %s830 = ssub.s32 %s22, 2
        // Predicated region
        $region81: #{decoder_layer.4} parent=79 // pred_check
          %p831 = pneg %p255
        $region82: #{decoder_layer.4} parent=79 // pred_check_branch
          %833 = sbr.rel (%p831) target = $region84
        $region83: #{decoder_layer.4} parent=79 // pred_region
          %p834 = scmp.lt.s32.totalorder %s28, 1
          %s835 = scalar_select %p834, %s28, 1
          %s836 = smul.addr %s835, 8
          %s837 = scalar_lea.vmem %s9, %s836
        $region84: #{decoder_layer.4} parent=79 // pred_fallthru
          _
      $region80: #{decoder_layer.4} parent=5 // pred_fallthru
        _
    $region6: #{decoder_layer.4} parent=1 // loop_footer
      %s26 = sadd.s32 1, %s22
    $region7: #{decoder_layer.4} parent=1 // loop_footer_branch
      %21 = sbr.rel target = $region3
    $region8: #{decoder_layer.4} parent=1 // loop_exit
      _
    %838 = vsyncpa [#allocation3], 1
    %s839 = scalar_lea.sflag [#allocation3], 1
    %840 = vsyncpa %s839, 1
    %841 = vsyncpa [#allocation5], 1
    %s842 = scalar_lea.sflag [#allocation5], 1
    %843 = vsyncpa %s842, 1
    %844 = vsyncpa [#allocation8], 1

// kernel: decoder_layer.3
$region0: #{decoder_layer.3}
  #allocation0 [shape = 'u32[]', space=smem, size = 0x4, offset = 0x4, fixed_abs, tag = 'smem constant byte address 0x4 - core index']
  #allocation1 [shape = 'u32[72,128]{1,0:T(1,128)}', space=vmem, size = 0x9000, scoped, tag = 'internal scratch']
  %s0 = inlined_call_operand.vmem [shape: f32[2,8,32], index: 0, kind: input, shape index: {}]
  %s1 = inlined_call_operand.hbm [shape: f32[2,1,8,8], index: 1, kind: input, shape index: {}]
  %s2 = inlined_call_operand.hbm [shape: f32[32,96], index: 2, kind: input, shape index: {}]
  %s3 = inlined_call_operand.vmem [shape: f32[1,96], index: 3, kind: input, shape index: {}]
  %s4 = inlined_call_operand.hbm [shape: f32[32,32], index: 4, kind: input, shape index: {}]
  %s5 = inlined_call_operand.vmem [shape: f32[1,32], index: 5, kind: input, shape index: {}]
  %s6 = inlined_call_operand.vmem [shape: f32[1,32], index: 6, kind: input, shape index: {}]
  %s7 = inlined_call_operand.vmem [shape: f32[1,32], index: 7, kind: input, shape index: {}]
  %s8 = inlined_call_operand.vmem [shape: f32[2,8,32], index: 8, kind: output, shape index: {}]
  %s9 = sld [smem:[#allocation0]]
  $region77: #{decoder_layer.3} parent=0
    _
  %s11 = ssub.s32 1, %s9
  %s12 = scalar_select 0, %s11, %s9
  $region1: #{decoder_layer.3} parent=0
    #allocation2 [shape = 'u8[8192]{0}', space=vmem, size = 0x2000, scoped, tag = 'input window, operand 1']
    #allocation3 [shape = 's32[2]{0}', space=sflag, size = 0x8, scoped, tag = 'scoped memory for decoder_layer.3']
    #allocation4 [shape = 'u8[16384]{0}', space=vmem, size = 0x4000, scoped, tag = 'input window, operand 2, single buffered']
    #allocation5 [shape = 's32[1]{0}', space=sflag, size = 0x4, scoped, tag = 'scoped memory for decoder_layer.3']
    #allocation6 [shape = 'u8[16384]{0}', space=vmem, size = 0x4000, scoped, tag = 'input window, operand 4, single buffered']
    %13 = vsyncpa [#allocation3], 0
    %s14 = scalar_lea.sflag [#allocation3], 1
    %15 = vsyncpa %s14, 0
    %16 = vsyncpa [#allocation5], 0
    loop: start=0, step=1, limit=4
    $region2: #{decoder_layer.3} parent=1 // loop_pre_header
      _
    $region3: #{decoder_layer.3} parent=1 // loop_header
      %s18 = sphi 0, %s22
      %p19 = scmp.ge.s32.totalorder %s18, 4
      %s28 = sphi 0, %s30
      %s31 = sphi 0, %s28
      %s32 = sphi 0, %s31
      %s48 = sphi 0, %s32
      %s54 = sphi 0, %s56
      %s57 = sphi 0, %s54
      %s58 = sphi 0, %s57
      %s74 = sphi 0, %s58
      %s78 = sphi 0, %s78
      %s80 = sphi 0, %s78
      %s81 = sphi 0, %s80
      %s95 = sphi 0, %s81
      %s99 = sphi 0, %s99
      %s101 = sphi 0, %s99
      %s102 = sphi 0, %s101
      %s116 = sphi 0, %s102
      %s120 = sphi 0, %s120
      %s122 = sphi 0, %s120
      %s123 = sphi 0, %s122
      %s137 = sphi 0, %s123
      %s141 = sphi 0, %s141
      %s143 = sphi 0, %s141
      %s144 = sphi 0, %s143
      %s158 = sphi 0, %s144
      %s162 = sphi 0, %s162
      %s164 = sphi 0, %s162
      %s165 = sphi 0, %s164
      %s179 = sphi 0, %s165
      %s183 = sphi 0, %s183
      %s185 = sphi 0, %s183
      %s186 = sphi 0, %s185
      %s200 = sphi 0, %s186
      %s206 = sphi 0, %s208
      %s209 = sphi 0, %s206
      %s210 = sphi 0, %s209
      %s226 = sphi 0, %s210
    $region4: #{decoder_layer.3} parent=1 // loop_header_branch
      %21 = sbr.rel (%p19) target = $region8
    $region5: #{decoder_layer.3} parent=1 // loop_body
      %s23 = ssub.s32 %s18, 1
      %s24 = ssub.s32 %s18, 2
      %s25 = sadd.s32 %s18, 1
      %s26 = ssub.s32 %s18, %s25
      %p27 = scmp.eq.s32.totalorder %s26, 0
      %s29 = sadd.s32 %s28, 1
      %s30 = scalar_select %p27, %s28, %s29
      %p33 = pneg %p27
      %p34 = scmp.eq.s32.totalorder %s18, 1
      %p35 = por %p33, %p34
      %p36 = scmp.ne.s32.totalorder %s28, %s31
      %p37 = scmp.eq.s32.totalorder %s18, 0
      %p38 = por %p36, %p37
      %p39 = scmp.ne.s32.totalorder %s28, %s31
      %p40 = scmp.eq.s32.totalorder %s23, 1
      %p41 = por %p39, %p40
      %p42 = scmp.ne.s32.totalorder %s31, %s32
      %p43 = scmp.eq.s32.totalorder %s23, 0
      %p44 = por %p42, %p43
      %p45 = scmp.ne.s32.totalorder %s31, %s32
      %p46 = scmp.eq.s32.totalorder %s24, 1
      %p47 = por %p45, %p46
      %p49 = scmp.ne.s32.totalorder %s32, %s48
      %p50 = scmp.eq.s32.totalorder %s24, 0
      %p51 = por %p49, %p50
      %s52 = ssub.s32 %s18, %s25
      %p53 = scmp.eq.s32.totalorder %s52, 0
      %s55 = sadd.s32 %s54, 1
      %s56 = scalar_select %p53, %s54, %s55
      %p59 = pneg %p53
      %p60 = scmp.eq.s32.totalorder %s18, 1
      %p61 = por %p59, %p60
      %p62 = scmp.ne.s32.totalorder %s54, %s57
      %p63 = scmp.eq.s32.totalorder %s18, 0
      %p64 = por %p62, %p63
      %p65 = scmp.ne.s32.totalorder %s54, %s57
      %p66 = scmp.eq.s32.totalorder %s23, 1
      %p67 = por %p65, %p66
      %p68 = scmp.ne.s32.totalorder %s57, %s58
      %p69 = scmp.eq.s32.totalorder %s23, 0
      %p70 = por %p68, %p69
      %p71 = scmp.ne.s32.totalorder %s57, %s58
      %p72 = scmp.eq.s32.totalorder %s24, 1
      %p73 = por %p71, %p72
      %p75 = scmp.ne.s32.totalorder %s58, %s74
      %p76 = scmp.eq.s32.totalorder %s24, 0
      %p77 = por %p75, %p76
      %s79 = sadd.s32 %s78, 1
      %p82 = scmp.eq.s32.totalorder %s18, 1
      %p83 = scmp.ne.s32.totalorder %s78, %s80
      %p84 = scmp.eq.s32.totalorder %s18, 0
      %p85 = por %p83, %p84
      %p86 = scmp.ne.s32.totalorder %s78, %s80
      %p87 = scmp.eq.s32.totalorder %s23, 1
      %p88 = por %p86, %p87
      %p89 = scmp.ne.s32.totalorder %s80, %s81
      %p90 = scmp.eq.s32.totalorder %s23, 0
      %p91 = por %p89, %p90
      %p92 = scmp.ne.s32.totalorder %s80, %s81
      %p93 = scmp.eq.s32.totalorder %s24, 1
      %p94 = por %p92, %p93
      %p96 = scmp.ne.s32.totalorder %s81, %s95
      %p97 = scmp.eq.s32.totalorder %s24, 0
      %p98 = por %p96, %p97
      %s100 = sadd.s32 %s99, 1
      %p103 = scmp.eq.s32.totalorder %s18, 1
      %p104 = scmp.ne.s32.totalorder %s99, %s101
      %p105 = scmp.eq.s32.totalorder %s18, 0
      %p106 = por %p104, %p105
      %p107 = scmp.ne.s32.totalorder %s99, %s101
      %p108 = scmp.eq.s32.totalorder %s23, 1
      %p109 = por %p107, %p108
      %p110 = scmp.ne.s32.totalorder %s101, %s102
      %p111 = scmp.eq.s32.totalorder %s23, 0
      %p112 = por %p110, %p111
      %p113 = scmp.ne.s32.totalorder %s101, %s102
      %p114 = scmp.eq.s32.totalorder %s24, 1
      %p115 = por %p113, %p114
      %p117 = scmp.ne.s32.totalorder %s102, %s116
      %p118 = scmp.eq.s32.totalorder %s24, 0
      %p119 = por %p117, %p118
      %s121 = sadd.s32 %s120, 1
      %p124 = scmp.eq.s32.totalorder %s18, 1
      %p125 = scmp.ne.s32.totalorder %s120, %s122
      %p126 = scmp.eq.s32.totalorder %s18, 0
      %p127 = por %p125, %p126
      %p128 = scmp.ne.s32.totalorder %s120, %s122
      %p129 = scmp.eq.s32.totalorder %s23, 1
      %p130 = por %p128, %p129
      %p131 = scmp.ne.s32.totalorder %s122, %s123
      %p132 = scmp.eq.s32.totalorder %s23, 0
      %p133 = por %p131, %p132
      %p134 = scmp.ne.s32.totalorder %s122, %s123
      %p135 = scmp.eq.s32.totalorder %s24, 1
      %p136 = por %p134, %p135
      %p138 = scmp.ne.s32.totalorder %s123, %s137
      %p139 = scmp.eq.s32.totalorder %s24, 0
      %p140 = por %p138, %p139
      %s142 = sadd.s32 %s141, 1
      %p145 = scmp.eq.s32.totalorder %s18, 1
      %p146 = scmp.ne.s32.totalorder %s141, %s143
      %p147 = scmp.eq.s32.totalorder %s18, 0
      %p148 = por %p146, %p147
      %p149 = scmp.ne.s32.totalorder %s141, %s143
      %p150 = scmp.eq.s32.totalorder %s23, 1
      %p151 = por %p149, %p150
      %p152 = scmp.ne.s32.totalorder %s143, %s144
      %p153 = scmp.eq.s32.totalorder %s23, 0
      %p154 = por %p152, %p153
      %p155 = scmp.ne.s32.totalorder %s143, %s144
      %p156 = scmp.eq.s32.totalorder %s24, 1
      %p157 = por %p155, %p156
      %p159 = scmp.ne.s32.totalorder %s144, %s158
      %p160 = scmp.eq.s32.totalorder %s24, 0
      %p161 = por %p159, %p160
      %s163 = sadd.s32 %s162, 1
      %p166 = scmp.eq.s32.totalorder %s18, 1
      %p167 = scmp.ne.s32.totalorder %s162, %s164
      %p168 = scmp.eq.s32.totalorder %s18, 0
      %p169 = por %p167, %p168
      %p170 = scmp.ne.s32.totalorder %s162, %s164
      %p171 = scmp.eq.s32.totalorder %s23, 1
      %p172 = por %p170, %p171
      %p173 = scmp.ne.s32.totalorder %s164, %s165
      %p174 = scmp.eq.s32.totalorder %s23, 0
      %p175 = por %p173, %p174
      %p176 = scmp.ne.s32.totalorder %s164, %s165
      %p177 = scmp.eq.s32.totalorder %s24, 1
      %p178 = por %p176, %p177
      %p180 = scmp.ne.s32.totalorder %s165, %s179
      %p181 = scmp.eq.s32.totalorder %s24, 0
      %p182 = por %p180, %p181
      %s184 = sadd.s32 %s183, 1
      %p187 = scmp.eq.s32.totalorder %s18, 1
      %p188 = scmp.ne.s32.totalorder %s183, %s185
      %p189 = scmp.eq.s32.totalorder %s18, 0
      %p190 = por %p188, %p189
      %p191 = scmp.ne.s32.totalorder %s183, %s185
      %p192 = scmp.eq.s32.totalorder %s23, 1
      %p193 = por %p191, %p192
      %p194 = scmp.ne.s32.totalorder %s185, %s186
      %p195 = scmp.eq.s32.totalorder %s23, 0
      %p196 = por %p194, %p195
      %p197 = scmp.ne.s32.totalorder %s185, %s186
      %p198 = scmp.eq.s32.totalorder %s24, 1
      %p199 = por %p197, %p198
      %p201 = scmp.ne.s32.totalorder %s186, %s200
      %p202 = scmp.eq.s32.totalorder %s24, 0
      %p203 = por %p201, %p202
      %s204 = ssub.s32 %s18, %s25
      %p205 = scmp.eq.s32.totalorder %s204, 0
      %s207 = sadd.s32 %s206, 1
      %s208 = scalar_select %p205, %s206, %s207
      %p211 = pneg %p205
      %p212 = scmp.eq.s32.totalorder %s18, 1
      %p213 = por %p211, %p212
      %p214 = scmp.ne.s32.totalorder %s206, %s209
      %p215 = scmp.eq.s32.totalorder %s18, 0
      %p216 = por %p214, %p215
      %p217 = scmp.ne.s32.totalorder %s206, %s209
      %p218 = scmp.eq.s32.totalorder %s23, 1
      %p219 = por %p217, %p218
      %p220 = scmp.ne.s32.totalorder %s209, %s210
      %p221 = scmp.eq.s32.totalorder %s23, 0
      %p222 = por %p220, %p221
      %p223 = scmp.ne.s32.totalorder %s209, %s210
      %p224 = scmp.eq.s32.totalorder %s24, 1
      %p225 = por %p223, %p224
      %p227 = scmp.ne.s32.totalorder %s210, %s226
      %p228 = scmp.eq.s32.totalorder %s24, 0
      %p229 = por %p227, %p228
      %p230 = scmp.le.s32.totalorder 1, %s18
      %p231 = scmp.lt.s32.totalorder %s18, 3
      %p232 = pnand %p230, %p231
      %p233 = pneg %p232
      // Predicated region
      $region9: #{decoder_layer.3} parent=5 // pred_check
        _
      $region10: #{decoder_layer.3} parent=5 // pred_check_branch
        %235 = sbr.rel (%p232) target = $region12
      $region11: #{decoder_layer.3} parent=5 // pred_region
        %s236 = ssub.s32 %s18, 1
        // Predicated region
        $region13: #{decoder_layer.3} parent=11 // pred_check
          %p237 = pneg %p91
        $region14: #{decoder_layer.3} parent=11 // pred_check_branch
          %239 = sbr.rel (%p237) target = $region16
        $region15: #{decoder_layer.3} parent=11 // pred_region
          %241 = vsyncadd [#allocation5], 0
          %s242 = sshll.u32 %s2, 4
          %s243 = int_to_ptr.hbm [resolvable:$true] %s242
          %s244 = sshll.u32 [#allocation4], 4
          %s245 = int_to_ptr.vmem [resolvable:$true] %s244
          %250 = dma.hbm_to_vmem [thread:$0]  %s243, 512, %s245, [#allocation5], 128, 128, 8
        $region16: #{decoder_layer.3} parent=11 // pred_fallthru
          _
        // Predicated region
        $region17: #{decoder_layer.3} parent=11 // pred_check
          %p251 = pneg %p112
        $region18: #{decoder_layer.3} parent=11 // pred_check_branch
          %253 = sbr.rel (%p251) target = $region20
        $region19: #{decoder_layer.3} parent=11 // pred_region
          _
        $region20: #{decoder_layer.3} parent=11 // pred_fallthru
          _
        // Predicated region
        $region21: #{decoder_layer.3} parent=11 // pred_check
          %p254 = pneg %p133
        $region22: #{decoder_layer.3} parent=11 // pred_check_branch
          %256 = sbr.rel (%p254) target = $region24
        $region23: #{decoder_layer.3} parent=11 // pred_region
          %258 = vsyncadd [#allocation5], 0
          %s259 = sshll.u32 %s4, 4
          %s260 = int_to_ptr.hbm [resolvable:$true] %s259
          %s261 = sshll.u32 [#allocation6], 4
          %s262 = int_to_ptr.vmem [resolvable:$true] %s261
          %267 = dma.hbm_to_vmem [thread:$0]  %s260, 512, %s262, [#allocation5], 128, 128, 8
        $region24: #{decoder_layer.3} parent=11 // pred_fallthru
          _
        // Predicated region
        $region25: #{decoder_layer.3} parent=11 // pred_check
          %p268 = pneg %p154
        $region26: #{decoder_layer.3} parent=11 // pred_check_branch
          %270 = sbr.rel (%p268) target = $region28
        $region27: #{decoder_layer.3} parent=11 // pred_region
          _
        $region28: #{decoder_layer.3} parent=11 // pred_fallthru
          _
        // Predicated region
        $region29: #{decoder_layer.3} parent=11 // pred_check
          %p271 = pneg %p175
        $region30: #{decoder_layer.3} parent=11 // pred_check_branch
          %273 = sbr.rel (%p271) target = $region32
        $region31: #{decoder_layer.3} parent=11 // pred_region
          _
        $region32: #{decoder_layer.3} parent=11 // pred_fallthru
          _
        // Predicated region
        $region33: #{decoder_layer.3} parent=11 // pred_check
          %p274 = pneg %p196
        $region34: #{decoder_layer.3} parent=11 // pred_check_branch
          %276 = sbr.rel (%p274) target = $region36
        $region35: #{decoder_layer.3} parent=11 // pred_region
          _
        $region36: #{decoder_layer.3} parent=11 // pred_fallthru
          _
      $region12: #{decoder_layer.3} parent=5 // pred_fallthru
        _
      %p277 = scmp.lt.s32.totalorder %s18, 2
      // Predicated region
      $region37: #{decoder_layer.3} parent=5 // pred_check
        %p278 = pneg %p277
      $region38: #{decoder_layer.3} parent=5 // pred_check_branch
        %280 = sbr.rel (%p278) target = $region40
      $region39: #{decoder_layer.3} parent=5 // pred_region
        // Predicated region
        $region41: #{decoder_layer.3} parent=39 // pred_check
          %p281 = pneg %p38
        $region42: #{decoder_layer.3} parent=39 // pred_check_branch
          %283 = sbr.rel (%p281) target = $region44
        $region43: #{decoder_layer.3} parent=39 // pred_region
          %p284 = scmp.lt.s32.totalorder %s18, 1
          %s285 = scalar_select %p284, %s18, 1
          %s286 = smul.addr %s285, 8
          %s287 = scalar_lea.vmem %s0, %s286
        $region44: #{decoder_layer.3} parent=39 // pred_fallthru
          _
        // Predicated region
        $region45: #{decoder_layer.3} parent=39 // pred_check
          %p288 = pneg %p64
        $region46: #{decoder_layer.3} parent=39 // pred_check_branch
          %290 = sbr.rel (%p288) target = $region48
        $region47: #{decoder_layer.3} parent=39 // pred_region
          %s291 = sand.u32 %s54, 1
          %s292 = scalar_lea.sflag [#allocation3], %s291
          %s293 = sand.u32 %s54, 1
          %s294 = smul.addr %s293, 8
          %s295 = scalar_lea.vmem [#allocation2], %s294
          %297 = vsyncadd %s292, 0
          %s298 = smul.addr %s18, 8
          %s299 = scalar_lea.hbm %s1, %s298
          %s301 = sshll.u32 %s299, 4
          %s302 = int_to_ptr.hbm [resolvable:$true] %s301
          %s303 = sshll.u32 %s295, 4
          %s304 = int_to_ptr.vmem [resolvable:$true] %s303
          %306 = dma.hbm_to_vmem [thread:$0]  %s302, 128, %s304, %s292
        $region48: #{decoder_layer.3} parent=39 // pred_fallthru
          _
      $region40: #{decoder_layer.3} parent=5 // pred_fallthru
        _
      %p307 = scmp.le.s32.totalorder 1, %s18
      %p308 = scmp.lt.s32.totalorder %s18, 3
      %p309 = pnand %p307, %p308
      %p310 = pneg %p309
      // Predicated region
      $region49: #{decoder_layer.3} parent=5 // pred_check
        _
      $region50: #{decoder_layer.3} parent=5 // pred_check_branch
        %312 = sbr.rel (%p309) target = $region52
      $region51: #{decoder_layer.3} parent=5 // pred_region
        %s313 = ssub.s32 %s18, 1
        %s314 = sand.u32 %s57, 1
        %s315 = scalar_lea.sflag [#allocation3], %s314
        %s316 = sand.u32 %s57, 1
        %s317 = smul.addr %s316, 8
        %s318 = scalar_lea.vmem [#allocation2], %s317
        // Predicated region
        $region53: #{decoder_layer.3} parent=51 // pred_check
          %p319 = pneg %p70
        $region54: #{decoder_layer.3} parent=51 // pred_check_branch
          %321 = sbr.rel (%p319) target = $region56
        $region55: #{decoder_layer.3} parent=51 // pred_region
          %323 = dma.done %s315, 128
        $region56: #{decoder_layer.3} parent=51 // pred_fallthru
          _
        // Predicated region
        $region57: #{decoder_layer.3} parent=51 // pred_check
          %p324 = pneg %p91
        $region58: #{decoder_layer.3} parent=51 // pred_check_branch
          %326 = sbr.rel (%p324) target = $region60
        $region59: #{decoder_layer.3} parent=51 // pred_region
          %328 = dma.done [#allocation5], 512
        $region60: #{decoder_layer.3} parent=51 // pred_fallthru
          _
        // Predicated region
        $region61: #{decoder_layer.3} parent=51 // pred_check
          %p329 = pneg %p133
        $region62: #{decoder_layer.3} parent=51 // pred_check_branch
          %331 = sbr.rel (%p329) target = $region64
        $region63: #{decoder_layer.3} parent=51 // pred_region
          %333 = dma.done [#allocation5], 512
        $region64: #{decoder_layer.3} parent=51 // pred_fallthru
          _
        %p334 = scmp.lt.s32.totalorder %s23, 1
        %s335 = scalar_select %p334, %s23, 1
        %s336 = smul.addr %s335, 8
        %s337 = scalar_lea.vmem %s0, %s336
        %p338 = pneg %p44
        %p339 = pneg %p41
        %s340 = sand.u32 %s57, 1
        %s341 = scalar_lea.sflag [#allocation3], %s340
        %s342 = sand.u32 %s57, 1
        %s343 = smul.addr %s342, 8
        %s344 = scalar_lea.vmem [#allocation2], %s343
        %p345 = pneg %p70
        %p346 = pneg %p67
        %p347 = pneg %p91
        %p348 = pneg %p88
        %p349 = pneg %p112
        %p350 = pneg %p109
        %p351 = pneg %p133
        %p352 = pneg %p130
        %p353 = pneg %p154
        %p354 = pneg %p151
        %p355 = pneg %p175
        %p356 = pneg %p172
        %p357 = pneg %p196
        %p358 = pneg %p193
        %p359 = pneg %p222
        %p360 = pneg %p219
        %p361 = scmp.lt.s32.totalorder %s23, 1
        %s362 = scalar_select %p361, %s23, 1
        %s363 = smul.addr %s362, 8
        %s364 = scalar_lea.vmem %s8, %s363
        %p365 = scmp.lt.s32.totalorder %s23, 1
        %s366 = scalar_select %p365, %s23, 1
        %s367 = smul.addr %s366, 8
        %s368 = scalar_lea.vmem %s0, %s367
        %p369 = scmp.lt.s32.totalorder %s23, 1
        %s370 = scalar_select %p369, %s23, 1
        %s371 = smul.addr %s370, 8
        %s372 = scalar_lea.vmem %s8, %s371
        %v374 = vld [vmem:[%s368] sm:$0xff]
        %v375 = vld [vmem:[%s318] sm:$0xff]
        %v376 = vld [vmem:[#allocation4] sm:$0xff]
        %v377 = vld [vmem:[#allocation4 + $0x8] sm:$0xff]
        %v378 = vld [vmem:[#allocation4 + $0x10] sm:$0xff]
        %v379 = vld [vmem:[#allocation4 + $0x18] sm:$0xff]
        %v380 = vld [vmem:[%s3] sm:$0x1]
        %v381 = vpack.c.bf16 %v374, %v374
        %v382 = vpack.c.bf16 %v377, %v376
        %v383 = vpack.c.bf16 %v379, %v378
        %v385 = vperm.slane %v380, 0
        %vm387 = vcmask 261120
        %v389 = vsel %vm387, %v381, 0
        %391 = vmatpush.bf16.msra.mxu0 0
        %392 = vmatpush.bf16.msra.mxu0 0
        %393 = vmatpush.bf16.msra.mxu0 0
        %394 = vmatpush.bf16.msra.mxu0 0
        %395 = vmatpush.bf16.msra.mxu0 0
        %396 = vmatpush.bf16.msra.mxu0 0
        %397 = vmatpush.bf16.msra.mxu0 %v383
        %398 = vmatpush.bf16.msra.mxu0 %v382
        %399 = vmatmul.bf16.gmra.mxu0 %v389
        %v400 = vpop.f32.mrf.mxu0
        %v401 = vadd.f32 %v385, %v400
        %v402 = vpop.f32.mrf.mxu0
        %403 = vdwg.mxu0
        %v404 = vpack.c.bf16 %v401, %v401
        %406 = vrot.lane.b32.xlu0 %v404, 96
        %v407 = vpop.permute.xlu0 %406
        %vm408 = vcmask 64512
        %v410 = vsel %vm408, %v404, 0
        %v413 = vsel %vm408, %v407, 0
        %415 = vmatpush.bf16.xpose.msra.mxu0 0
        %416 = vmatpush.bf16.xpose.msra.mxu0 0
        %417 = vmatpush.bf16.xpose.msra.mxu0 0
        %418 = vmatpush.bf16.xpose.msra.mxu0 0
        %419 = vmatpush.bf16.xpose.msra.mxu0 0
        %420 = vmatpush.bf16.xpose.msra.mxu0 0
        %421 = vmatpush.bf16.xpose.msra.mxu0 0
        %422 = vmatpush.bf16.xpose.msra.mxu0 %v413
        %423 = vmatmul.bf16.gmra.mxu0 %v410
        %v424 = vpop.f32.mrf.mxu0
        %v425 = vadd.f32 0.0, %v424
        %v426 = vpop.f32.mrf.mxu0
        %427 = vdwg.mxu0
        %v428 = vmul.f32 %v425, 0.35355338
        %vm429 = vcmp.eq.f32.partialorder %v375, 0.0
        %v430 = vsel %vm429, -1e+09, %v428
        %v431 = vsel %vm408, %v430, -inf
        %432 = vmax.xlane.f32.xlu0 %v431
        %v433 = vpop.xlane.xlu0 %432
        %v434 = vsub.f32 %v430, %v433
        %v435 = vmul.f32 %v434, 1.442695
        %v436 = vpow.pop %v435
        %v437 = vsel %vm408, %v436, 0.0
        %438 = vadd.xlane.f32.xlu0 %v437
        %v439 = vpop.xlane.xlu0 %438
        %v440 = vrcp.pop %v439
        %v441 = vmul.f32 %v436, %v440
        %v442 = vpack.c.bf16 %v441, %v441
        %443 = vrot.lane.b32.xlu0 %v404, 64
        %v444 = vpop.permute.xlu0 %443
        %v446 = vsel %vm408, %v442, 0
        %vm448 = vcmask 1043456
        %v450 = vsel %vm448, %v444, 0
        %452 = vmatpush.bf16.msra.mxu0 0
        %453 = vmatpush.bf16.msra.mxu0 0
        %454 = vmatpush.bf16.msra.mxu0 0
        %455 = vmatpush.bf16.msra.mxu0 0
        %456 = vmatpush.bf16.msra.mxu0 0
        %457 = vmatpush.bf16.msra.mxu0 0
        %458 = vmatpush.bf16.msra.mxu0 0
        %459 = vmatpush.bf16.msra.mxu0 %v450
        %460 = vmatmul.bf16.gmra.mxu0 %v446
        %v461 = vpop.f32.mrf.mxu0
        %v462 = vadd.f32 0.0, %v461
        %v463 = vpop.f32.mrf.mxu0
        %464 = vdwg.mxu0
        %465 = vrot.lane.b32.xlu0 %v404, 120
        %v466 = vpop.permute.xlu0 %465
        %467 = vrot.lane.b32.xlu0 %v404, 88
        %v468 = vpop.permute.xlu0 %467
        %v470 = vsel %vm408, %v466, 0
        %v473 = vsel %vm408, %v468, 0
        %475 = vmatpush.bf16.xpose.msra.mxu0 0
        %476 = vmatpush.bf16.xpose.msra.mxu0 0
        %477 = vmatpush.bf16.xpose.msra.mxu0 0
        %478 = vmatpush.bf16.xpose.msra.mxu0 0
        %479 = vmatpush.bf16.xpose.msra.mxu0 0
        %480 = vmatpush.bf16.xpose.msra.mxu0 0
        %481 = vmatpush.bf16.xpose.msra.mxu0 0
        %482 = vmatpush.bf16.xpose.msra.mxu0 %v473
        %483 = vmatmul.bf16.gmra.mxu0 %v470
        %v484 = vpop.f32.mrf.mxu0
        %v485 = vadd.f32 0.0, %v484
        %v486 = vpop.f32.mrf.mxu0
        %487 = vdwg.mxu0
        %v488 = vmul.f32 %v485, 0.35355338
        %v489 = vsel %vm429, -1e+09, %v488
        %v490 = vsel %vm408, %v489, -inf
        %491 = vmax.xlane.f32.xlu0 %v490
        %v492 = vpop.xlane.xlu0 %491
        %v493 = vsub.f32 %v489, %v492
        %v494 = vmul.f32 %v493, 1.442695
        %v495 = vpow.pop %v494
        %v496 = vsel %vm408, %v495, 0.0
        %497 = vadd.xlane.f32.xlu0 %v496
        %v498 = vpop.xlane.xlu0 %497
        %v499 = vrcp.pop %v498
        %v500 = vmul.f32 %v495, %v499
        %v501 = vpack.c.bf16 %v500, %v500
        %502 = vrot.lane.b32.xlu0 %v404, 56
        %v503 = vpop.permute.xlu0 %502
        %v505 = vsel %vm408, %v501, 0
        %v508 = vsel %vm448, %v503, 0
        %510 = vmatpush.bf16.msra.mxu0 0
        %511 = vmatpush.bf16.msra.mxu0 0
        %512 = vmatpush.bf16.msra.mxu0 0
        %513 = vmatpush.bf16.msra.mxu0 0
        %514 = vmatpush.bf16.msra.mxu0 0
        %515 = vmatpush.bf16.msra.mxu0 0
        %516 = vmatpush.bf16.msra.mxu0 0
        %517 = vmatpush.bf16.msra.mxu0 %v508
        %518 = vmatmul.bf16.gmra.mxu0 %v505
        %v519 = vpop.f32.mrf.mxu0
        %v520 = vadd.f32 0.0, %v519
        %v521 = vpop.f32.mrf.mxu0
        %522 = vdwg.mxu0
        %523 = vrot.lane.b32.xlu0 %v404, 112
        %v524 = vpop.permute.xlu0 %523
        %525 = vrot.lane.b32.xlu0 %v404, 80
        %v526 = vpop.permute.xlu0 %525
        %v528 = vsel %vm408, %v524, 0
        %v531 = vsel %vm408, %v526, 0
        %533 = vmatpush.bf16.xpose.msra.mxu0 0
        %534 = vmatpush.bf16.xpose.msra.mxu0 0
        %535 = vmatpush.bf16.xpose.msra.mxu0 0
        %536 = vmatpush.bf16.xpose.msra.mxu0 0
        %537 = vmatpush.bf16.xpose.msra.mxu0 0
        %538 = vmatpush.bf16.xpose.msra.mxu0 0
        %539 = vmatpush.bf16.xpose.msra.mxu0 0
        %540 = vmatpush.bf16.xpose.msra.mxu0 %v531
        %541 = vmatmul.bf16.gmra.mxu0 %v528
        %v542 = vpop.f32.mrf.mxu0
        %v543 = vadd.f32 0.0, %v542
        %v544 = vpop.f32.mrf.mxu0
        %545 = vdwg.mxu0
        %v546 = vmul.f32 %v543, 0.35355338
        %v547 = vsel %vm429, -1e+09, %v546
        %v548 = vsel %vm408, %v547, -inf
        %549 = vmax.xlane.f32.xlu0 %v548
        %v550 = vpop.xlane.xlu0 %549
        %v551 = vsub.f32 %v547, %v550
        %v552 = vmul.f32 %v551, 1.442695
        %v553 = vpow.pop %v552
        %v554 = vsel %vm408, %v553, 0.0
        %555 = vadd.xlane.f32.xlu0 %v554
        %v556 = vpop.xlane.xlu0 %555
        %v557 = vrcp.pop %v556
        %v558 = vmul.f32 %v553, %v557
        %v559 = vpack.c.bf16 %v558, %v558
        %560 = vrot.lane.b32.xlu0 %v404, 48
        %v561 = vpop.permute.xlu0 %560
        %v563 = vsel %vm408, %v559, 0
        %v566 = vsel %vm448, %v561, 0
        %568 = vmatpush.bf16.msra.mxu0 0
        %569 = vmatpush.bf16.msra.mxu0 0
        %570 = vmatpush.bf16.msra.mxu0 0
        %571 = vmatpush.bf16.msra.mxu0 0
        %572 = vmatpush.bf16.msra.mxu0 0
        %573 = vmatpush.bf16.msra.mxu0 0
        %574 = vmatpush.bf16.msra.mxu0 0
        %575 = vmatpush.bf16.msra.mxu0 %v566
        %576 = vmatmul.bf16.gmra.mxu0 %v563
        %v577 = vpop.f32.mrf.mxu0
        %v578 = vadd.f32 0.0, %v577
        %v579 = vpop.f32.mrf.mxu0
        %580 = vdwg.mxu0
        %581 = vrot.lane.b32.xlu0 %v404, 104
        %v582 = vpop.permute.xlu0 %581
        %583 = vrot.lane.b32.xlu0 %v404, 72
        %v584 = vpop.permute.xlu0 %583
        %v586 = vsel %vm408, %v582, 0
        %v589 = vsel %vm408, %v584, 0
        %591 = vmatpush.bf16.xpose.msra.mxu0 0
        %592 = vmatpush.bf16.xpose.msra.mxu0 0
        %593 = vmatpush.bf16.xpose.msra.mxu0 0
        %594 = vmatpush.bf16.xpose.msra.mxu0 0
        %595 = vmatpush.bf16.xpose.msra.mxu0 0
        %596 = vmatpush.bf16.xpose.msra.mxu0 0
        %597 = vmatpush.bf16.xpose.msra.mxu0 0
        %598 = vmatpush.bf16.xpose.msra.mxu0 %v589
        %599 = vmatmul.bf16.gmra.mxu0 %v586
        %v600 = vpop.f32.mrf.mxu0
        %v601 = vadd.f32 0.0, %v600
        %v602 = vpop.f32.mrf.mxu0
        %603 = vdwg.mxu0
        %v604 = vmul.f32 %v601, 0.35355338
        %v605 = vsel %vm429, -1e+09, %v604
        %v606 = vsel %vm408, %v605, -inf
        %607 = vmax.xlane.f32.xlu0 %v606
        %v608 = vpop.xlane.xlu0 %607
        %v609 = vsub.f32 %v605, %v608
        %v610 = vmul.f32 %v609, 1.442695
        %v611 = vpow.pop %v610
        %v612 = vsel %vm408, %v611, 0.0
        %613 = vadd.xlane.f32.xlu0 %v612
        %v614 = vpop.xlane.xlu0 %613
        %v615 = vrcp.pop %v614
        %v616 = vmul.f32 %v611, %v615
        %v617 = vpack.c.bf16 %v616, %v616
        %618 = vrot.lane.b32.xlu0 %v404, 40
        %v619 = vpop.permute.xlu0 %618
        %v621 = vsel %vm408, %v617, 0
        %v624 = vsel %vm448, %v619, 0
        %626 = vmatpush.bf16.msra.mxu0 0
        %627 = vmatpush.bf16.msra.mxu0 0
        %628 = vmatpush.bf16.msra.mxu0 0
        %629 = vmatpush.bf16.msra.mxu0 0
        %630 = vmatpush.bf16.msra.mxu0 0
        %631 = vmatpush.bf16.msra.mxu0 0
        %632 = vmatpush.bf16.msra.mxu0 0
        %633 = vmatpush.bf16.msra.mxu0 %v624
        %634 = vmatmul.bf16.gmra.mxu0 %v621
        %v635 = vpop.f32.mrf.mxu0
        %v636 = vadd.f32 0.0, %v635
        %v637 = vpop.f32.mrf.mxu0
        %638 = vdwg.mxu0
        %640 = vrot.lane.b32.xlu0 %v520, 8
        %v641 = vpop.permute.xlu0 %640
        %644 = vrot.lane.b32.xlu0 %v578, 16
        %v645 = vpop.permute.xlu0 %644
        %648 = vrot.lane.b32.xlu0 %v636, 24
        %v649 = vpop.permute.xlu0 %648
        %v651 = vsel %vm408, %v462, %v641
        %vm652 = vcmask 130048
        %v653 = vsel %vm652, %v651, %v645
        %vm654 = vcmask 195584
        %v655 = vsel %vm654, %v653, %v649
        %v656 = vpack.c.bf16 %v655, %v655
        %v657 = vld [vmem:[#allocation6] sm:$0xff]
        %v658 = vld [vmem:[#allocation6 + $0x8] sm:$0xff]
        %v659 = vld [vmem:[#allocation6 + $0x10] sm:$0xff]
        %v660 = vld [vmem:[#allocation6 + $0x18] sm:$0xff]
        %v661 = vpack.c.bf16 %v658, %v657
        %v662 = vpack.c.bf16 %v660, %v659
        %v663 = vld [vmem:[%s5] sm:$0x1]
        %v665 = vperm.slane %v663, 0
        %v668 = vsel %vm387, %v656, 0
        %670 = vmatpush.bf16.msra.mxu0 0
        %671 = vmatpush.bf16.msra.mxu0 0
        %672 = vmatpush.bf16.msra.mxu0 0
        %673 = vmatpush.bf16.msra.mxu0 0
        %674 = vmatpush.bf16.msra.mxu0 0
        %675 = vmatpush.bf16.msra.mxu0 0
        %676 = vmatpush.bf16.msra.mxu0 %v662
        %677 = vmatpush.bf16.msra.mxu0 %v661
        %678 = vmatmul.bf16.gmra.mxu0 %v668
        %v679 = vpop.f32.mrf.mxu0
        %v680 = vadd.f32 %v665, %v679
        %v681 = vpop.f32.mrf.mxu0
        %682 = vdwg.mxu0
        %v683 = vadd.f32 %v374, %v680
        %v684 = vld [vmem:[%s6] sm:$0x1]
        %v685 = vld [vmem:[%s7] sm:$0x1]
        %v686 = vsel %vm387, %v683, 0.0
        %687 = vadd.xlane.f32.xlu0 %v686
        %v688 = vpop.xlane.xlu0 %687
        %v689 = vrcp.pop 32.0
        %v690 = vmul.f32 32.0, %v689
        %v691 = vsub.f32 1.0, %v690
        %v692 = vmul.f32 %v689, %v691
        %v693 = vadd.f32 %v689, %v692
        %vm694 = vweird.f32 %v689
        %v695 = vsel %vm694, %v689, %v693
        %v696 = vmul.f32 %v688, %v695
        %v697 = vsub.f32 %v683, %v696
        %v698 = vmul.f32 %v697, %v697
        %v699 = vsel %vm387, %v698, 0.0
        %700 = vadd.xlane.f32.xlu0 %v699
        %v701 = vpop.xlane.xlu0 %700
        %v702 = vmul.f32 %v701, %v695
        %v703 = vadd.f32 %v702, 1e-12
        %v704 = vrsqrt.pop %v703
        %v705 = vmul.f32 %v704, %v703
        %v706 = vmul.f32 %v705, %v704
        %v707 = vmul.f32 0.5, %v706
        %v708 = vsub.f32 1.5, %v707
        %v709 = vmul.f32 %v704, %v708
        %vm710 = vweird.f32 %v703
        %vm711 = vweird.f32 %v704
        %vm712 = vmor %vm710, %vm711
        %v713 = vsel %vm712, %v704, %v709
        %v714 = vmul.f32 %v697, %v713
        %v716 = vperm.slane %v684, 0
        %v718 = vmul.f32 %v714, %v716
        %v720 = vperm.slane %v685, 0
        %v722 = vadd.f32 %v718, %v720
        %723 = vst.msk [vmem:[%s372] sm:$0xff] %vm387, %v722
        %p724 = scmp.lt.s32.totalorder %s23, 1
        %s725 = scalar_select %p724, %s23, 1
        %s726 = smul.addr %s725, 8
        %s727 = scalar_lea.vmem %s8, %s726
        // Predicated region
        $region65: #{decoder_layer.3} parent=51 // pred_check
          %p728 = pneg %p219
        $region66: #{decoder_layer.3} parent=51 // pred_check_branch
          %730 = sbr.rel (%p728) target = $region68
        $region67: #{decoder_layer.3} parent=51 // pred_region
          _
        $region68: #{decoder_layer.3} parent=51 // pred_fallthru
          _
      $region52: #{decoder_layer.3} parent=5 // pred_fallthru
        _
      %p731 = scmp.le.s32.totalorder 2, %s18
      // Predicated region
      $region69: #{decoder_layer.3} parent=5 // pred_check
        %p732 = pneg %p731
      $region70: #{decoder_layer.3} parent=5 // pred_check_branch
        %734 = sbr.rel (%p732) target = $region72
      $region71: #{decoder_layer.3} parent=5 // pred_region
        %s735 = ssub.s32 %s18, 2
        // Predicated region
        $region73: #{decoder_layer.3} parent=71 // pred_check
          %p736 = pneg %p225
        $region74: #{decoder_layer.3} parent=71 // pred_check_branch
          %738 = sbr.rel (%p736) target = $region76
        $region75: #{decoder_layer.3} parent=71 // pred_region
          %p739 = scmp.lt.s32.totalorder %s24, 1
          %s740 = scalar_select %p739, %s24, 1
          %s741 = smul.addr %s740, 8
          %s742 = scalar_lea.vmem %s8, %s741
        $region76: #{decoder_layer.3} parent=71 // pred_fallthru
          _
      $region72: #{decoder_layer.3} parent=5 // pred_fallthru
        _
    $region6: #{decoder_layer.3} parent=1 // loop_footer
      %s22 = sadd.s32 1, %s18
    $region7: #{decoder_layer.3} parent=1 // loop_footer_branch
      %17 = sbr.rel target = $region3
    $region8: #{decoder_layer.3} parent=1 // loop_exit
      _
    %743 = vsyncpa [#allocation3], 1
    %s744 = scalar_lea.sflag [#allocation3], 1
    %745 = vsyncpa %s744, 1
    %746 = vsyncpa [#allocation5], 1

</llo_original>
